<compile_context>
chip_gen: v6e
topology: v6e:2x2x1
jax: 0.10.0
libtpu: 0.0.40
codegen_flags: <defaults>
</compile_context>

<pallas_src>
import functools
import math

import jax
import jax.numpy as jnp
from jax.experimental import pallas as pl
from jax.experimental.pallas import tpu as pltpu


_BN_EPS = 1e-5
_VMEM_LIMIT = 48 * 1024 * 1024   # fits under v7x's 64 MiB physical VMEM


def _pick_tile(dim, prefer):
    for t in prefer:
        if dim % t == 0:
            return t
    return dim  # full-dim block (always legal)


def _pick_tn(cout):
    # >=2 parallel tiles for Cout>=256 (v7x megacore), 128-lane tiles otherwise.
    return 256 if cout >= 512 else min(cout, 128)


# ----------------------------------------------------------------------------
# Fused stride-1 3x3 conv (in-kernel tap extraction) + BatchNorm batch stats
# ----------------------------------------------------------------------------

def _conv3x3s1_kernel(xp_ref, w_ref, y_ref, sum_ref, ssq_ref,
                      acc_ref, s_acc, q_acc, *, Ho, Wo, C):
    # grid = (cout_tiles [parallel, slow], batch [arbitrary, fast])
    n = pl.program_id(1)

    @pl.when(n == 0)
    def _():
        s_acc[...] = jnp.zeros_like(s_acc)
        q_acc[...] = jnp.zeros_like(q_acc)

    # 9 shifted-window matmuls accumulated in f32 VMEM scratch.
    for t in range(9):
        dy, dx = divmod(t, 3)
        a = xp_ref[0, dy:dy + Ho, dx:dx + Wo, :].reshape(Ho * Wo, C)
        p = jnp.dot(a, w_ref[t], preferred_element_type=jnp.float32)
        if t == 0:
            acc_ref[...] = p
        else:
            acc_ref[...] += p

    y = acc_ref[...]
    y_ref[...] = y.astype(y_ref.dtype)

    # Partial per-channel stats folded to (8, tn); final fold at the last step.
    r = y.reshape(Ho * Wo // 8, 8, y.shape[-1])
    s_acc[...] += jnp.sum(r, axis=0)
    q_acc[...] += jnp.sum(r * r, axis=0)

    @pl.when(n == pl.num_programs(1) - 1)
    def _():
        sum_ref[...] = jnp.sum(s_acc[...], axis=0, keepdims=True)
        ssq_ref[...] = jnp.sum(q_acc[...], axis=0, keepdims=True)


def _conv3x3_fused(x, w):
    """x: (N,H,W,C) NHWC; w: (Cout,Cin,3,3) PyTorch layout; stride 1, pad 1."""
    N, H, W, C = x.shape
    cout = w.shape[0]
    Hp, Wp = H + 2, W + 2
    mblk = H * W
    xp = jnp.pad(x.astype(jnp.bfloat16), ((0, 0), (1, 1), (1, 1), (0, 0)))
    wt = jnp.transpose(w, (2, 3, 1, 0)).reshape(9, C, cout).astype(jnp.bfloat16)
    tn = _pick_tn(cout)
    assert cout % tn == 0 and mblk % 8 == 0
    grid = (cout // tn, N)
    kern = functools.partial(_conv3x3s1_kernel, Ho=H, Wo=W, C=C)
    y, s, q = pl.pallas_call(
        kern,
        out_shape=(jax.ShapeDtypeStruct((N * mblk, cout), jnp.bfloat16),
                   jax.ShapeDtypeStruct((1, cout), jnp.float32),
                   jax.ShapeDtypeStruct((1, cout), jnp.float32)),
        grid=grid,
        in_specs=[pl.BlockSpec((1, Hp, Wp, C), lambda j, n: (n, 0, 0, 0)),
                  pl.BlockSpec((9, C, tn), lambda j, n: (0, 0, j))],
        out_specs=(pl.BlockSpec((mblk, tn), lambda j, n: (n, j)),
                   pl.BlockSpec((1, tn), lambda j, n: (0, j)),
                   pl.BlockSpec((1, tn), lambda j, n: (0, j))),
        scratch_shapes=[pltpu.VMEM((mblk, tn), jnp.float32),
                        pltpu.VMEM((8, tn), jnp.float32),
                        pltpu.VMEM((8, tn), jnp.float32)],
        compiler_params=pltpu.CompilerParams(
            dimension_semantics=("parallel", "arbitrary"),
            vmem_limit_bytes=_VMEM_LIMIT),
    )(xp, wt)
    return y, (s, q), (N, H, W)


# ----------------------------------------------------------------------------
# Fallback conv matmul (im2col in XLA) + BatchNorm batch stats
# Used only for the stem (Cin=3), stride-2 convs and the tiny 4x4 layer4 maps.
# ----------------------------------------------------------------------------

def _matmul_stats_kernel(a_ref, b_ref, y_ref, sum_ref, ssq_ref, s_acc, q_acc):
    # grid = (N_tiles [parallel, slow], M_tiles [arbitrary, fast])
    i = pl.program_id(1)
    y = jnp.dot(a_ref[...], b_ref[...], preferred_element_type=jnp.float32)
    y_ref[...] = y.astype(y_ref.dtype)

    @pl.when(i == 0)
    def _():
        s_acc[...] = jnp.zeros_like(s_acc)
        q_acc[...] = jnp.zeros_like(q_acc)

    r = y.reshape(y.shape[0] // 8, 8, y.shape[1])
    s_acc[...] += jnp.sum(r, axis=0)
    q_acc[...] += jnp.sum(r * r, axis=0)

    @pl.when(i == pl.num_programs(1) - 1)
    def _():
        sum_ref[...] = jnp.sum(s_acc[...], axis=0, keepdims=True)
        ssq_ref[...] = jnp.sum(q_acc[...], axis=0, keepdims=True)


def matmul_with_stats(a, b):
    """a:(M,K) bf16, b:(K,N) bf16 -> (y bf16 (M,N), sum (1,N) f32, sumsq (1,N) f32)."""
    M, K = a.shape
    K2, N = b.shape
    assert K == K2
    tm = _pick_tile(M, (512, 256, 128))
    tn = _pick_tn(N)
    assert tm % 8 == 0 and M % tm == 0 and N % tn == 0
    grid = (N // tn, M // tm)  # weight tile on the slow axis -> stays resident
    return pl.pallas_call(
        _matmul_stats_kernel,
        out_shape=(jax.ShapeDtypeStruct((M, N), jnp.bfloat16),
                   jax.ShapeDtypeStruct((1, N), jnp.float32),
                   jax.ShapeDtypeStruct((1, N), jnp.float32)),
        grid=grid,
        in_specs=[pl.BlockSpec((tm, K), lambda j, i: (i, 0)),
                  pl.BlockSpec((K, tn), lambda j, i: (0, j))],
        out_specs=(pl.BlockSpec((tm, tn), lambda j, i: (i, j)),
                   pl.BlockSpec((1, tn), lambda j, i: (0, j)),
                   pl.BlockSpec((1, tn), lambda j, i: (0, j))),
        scratch_shapes=[pltpu.VMEM((8, tn), jnp.float32),
                        pltpu.VMEM((8, tn), jnp.float32)],
        compiler_params=pltpu.CompilerParams(
            dimension_semantics=("parallel", "arbitrary"),
            vmem_limit_bytes=_VMEM_LIMIT),
    )(a, b)


def _im2col_3x3(x, stride):
    # x: (N, H, W, C) bf16, padding=1, kernel=3
    N, H, W, C = x.shape
    Ho, Wo = H // stride, W // stride
    xp = jnp.pad(x, ((0, 0), (1, 1), (1, 1), (0, 0)))
    cols = []
    for dy in range(3):
        for dx in range(3):
            cols.append(xp[:, dy:dy + stride * Ho:stride,
                           dx:dx + stride * Wo:stride, :])
    patches = jnp.concatenate(cols, axis=-1)                 # (N, Ho, Wo, 9*C)
    return patches.reshape(N * Ho * Wo, 9 * C), (N, Ho, Wo)


def conv3x3_bnstats(x, w, stride):
    """Returns (y (M,Cout) bf16, (sum,sumsq) f32, (N,Ho,Wo))."""
    N, H, W, C = x.shape
    cout = w.shape[0]
    if stride == 1 and C % 8 == 0 and W % 16 == 0:
        return _conv3x3_fused(x, w)
    # TODO(synk): phase-decompose stride-2 taps / small maps into the fused kernel.
    patches, dims = _im2col_3x3(x.astype(jnp.bfloat16), stride)
    wm = jnp.transpose(w, (2, 3, 1, 0)).reshape(-1, cout).astype(jnp.bfloat16)
    y, s, q = matmul_with_stats(patches, wm)
    return y, (s, q), dims


def conv1x1_bnstats(x, w, stride):
    # TODO(synk): fold the stride-2 subsample into the matmul BlockSpec instead
    # of the XLA slice (it is only input_bytes/4 of extra HBM traffic).
    xs = x.astype(jnp.bfloat16)[:, ::stride, ::stride, :]
    N, Ho, Wo, C = xs.shape
    cout = w.shape[0]
    wm = jnp.transpose(w, (2, 3, 1, 0)).reshape(C, cout).astype(jnp.bfloat16)
    y, s, q = matmul_with_stats(xs.reshape(N * Ho * Wo, C), wm)
    return y, (s, q), (N, Ho, Wo)


# ----------------------------------------------------------------------------
# Fused BatchNorm normalize (+ residual / shortcut-BN) (+ ReLU) kernels
# ----------------------------------------------------------------------------

def _bn_common(y, s_ref, q_ref, g_ref, b_ref, m_total):
    y = y.astype(jnp.float32)
    mean = s_ref[...] * (1.0 / m_total)
    var = jnp.maximum(q_ref[...] * (1.0 / m_total) - mean * mean, 0.0)
    scale = jax.lax.rsqrt(var + _BN_EPS) * g_ref[...]
    return (y - mean) * scale + b_ref[...]


def _bn_act_kernel(y_ref, s_ref, q_ref, g_ref, b_ref, o_ref, *, m_total, relu):
    out = _bn_common(y_ref[...], s_ref, q_ref, g_ref, b_ref, m_total)
    if relu:
        out = jnp.maximum(out, 0.0)
    o_ref[...] = out.astype(o_ref.dtype)


def _bn_add_identity_kernel(y_ref, s_ref, q_ref, g_ref, b_ref, r_ref, o_ref,
                            *, m_total):
    out = _bn_common(y_ref[...], s_ref, q_ref, g_ref, b_ref, m_total)
    out = out + r_ref[...].astype(jnp.float32)
    o_ref[...] = jnp.maximum(out, 0.0).astype(o_ref.dtype)


def _bn_add_bn_kernel(y_ref, s_ref, q_ref, g_ref, b_ref,
                      r_ref, rs_ref, rq_ref, rg_ref, rb_ref, o_ref, *, m_total):
    main = _bn_common(y_ref[...], s_ref, q_ref, g_ref, b_ref, m_total)
    sc = _bn_common(r_ref[...], rs_ref, rq_ref, rg_ref, rb_ref, m_total)
    o_ref[...] = jnp.maximum(main + sc, 0.0).astype(o_ref.dtype)


def bn_finalize(y, stats, gamma, beta, *, relu, residual=None, residual_bn=None,
                out_dtype=jnp.bfloat16):
    """y:(M,C) bf16 conv output; stats=(sum, sumsq) with shape (1,C) f32."""
    M, C = y.shape
    m_total = float(M)
    s, q = stats
    g = gamma.reshape(1, C).astype(jnp.float32)
    b = beta.reshape(1, C).astype(jnp.float32)

    # Lane-densify the 64-channel path: view (M,64) as (M/2,128). BN is
    # per-channel, so the per-channel vectors simply repeat every 64 lanes.
    fold = 2 if (C == 64 and M % 2 == 0 and residual_bn is None) else 1
    if fold > 1:
        y = y.reshape(M // fold, C * fold)
        s = jnp.tile(s, (1, fold))
        q = jnp.tile(q, (1, fold))
        g = jnp.tile(g, (1, fold))
        b = jnp.tile(b, (1, fold))
        if residual is not None:
            residual = residual.reshape(M // fold, C * fold)
    Mk, Ck = y.shape

    tm = _pick_tile(Mk, (512, 256, 128, 64, 32, 16, 8))
    grid = (Mk // tm,)
    row_spec = pl.BlockSpec((tm, Ck), lambda i: (i, 0))
    vec_spec = pl.BlockSpec((1, Ck), lambda i: (0, 0))
    out_shape = jax.ShapeDtypeStruct((Mk, Ck), out_dtype)
    cp = pltpu.CompilerParams(dimension_semantics=("parallel",))

    if residual is None:
        kern = functools.partial(_bn_act_kernel, m_total=m_total, relu=relu)
        out = pl.pallas_call(
            kern, out_shape=out_shape, grid=grid,
            in_specs=[row_spec, vec_spec, vec_spec, vec_spec, vec_spec],
            out_specs=row_spec, compiler_params=cp,
        )(y, s, q, g, b)
    elif residual_bn is None:
        kern = functools.partial(_bn_add_identity_kernel, m_total=m_total)
        out = pl.pallas_call(
            kern, out_shape=out_shape, grid=grid,
            in_specs=[row_spec, vec_spec, vec_spec, vec_spec, vec_spec, row_spec],
            out_specs=row_spec, compiler_params=cp,
        )(y, s, q, g, b, residual)
    else:
        rs, rq = residual_bn["stats"]
        rg = residual_bn["gamma"].reshape(1, C).astype(jnp.float32)
        rb = residual_bn["beta"].reshape(1, C).astype(jnp.float32)
        kern = functools.partial(_bn_add_bn_kernel, m_total=m_total)
        out = pl.pallas_call(
            kern, out_shape=out_shape, grid=grid,
            in_specs=[row_spec, vec_spec, vec_spec, vec_spec, vec_spec,
                      row_spec, vec_spec, vec_spec, vec_spec, vec_spec],
            out_specs=row_spec, compiler_params=cp,
        )(y, s, q, g, b, residual, rs, rq, rg, rb)
    return out.reshape(M, C)


# ----------------------------------------------------------------------------
# Fused avg_pool2d(4) + Linear head
# ----------------------------------------------------------------------------

def _pool_linear_kernel(x_ref, w_ref, b_ref, o_ref):
    pooled = jnp.mean(x_ref[...].astype(jnp.float32), axis=1)        # (N, C)
    o_ref[...] = jnp.dot(pooled, w_ref[...],
                         preferred_element_type=jnp.float32) + b_ref[...]


# ----------------------------------------------------------------------------
# Deterministic parameter construction (matches nn.Module shapes)
# ----------------------------------------------------------------------------

def _init_conv(key, cout, cin, k):
    fan_in = cin * k * k
    return (jax.random.normal(key, (cout, cin, k, k), jnp.float32)
            * (1.0 / math.sqrt(fan_in)))


def make_params(key, num_blocks=(2, 2, 2, 2), num_classes=10):
    keys = iter(jax.random.split(key, 128))
    params = {}
    params["conv1"] = _init_conv(next(keys), 64, 3, 3)
    params["bn1"] = (jnp.ones(64, jnp.float32), jnp.zeros(64, jnp.float32))
    in_planes = 64
    layers = []
    for planes, nb, stride in zip((64, 128, 256, 512), num_blocks, (1, 2, 2, 2)):
        blocks = []
        for s in [stride] + [1] * (nb - 1):
            blk = {
                "stride": s,
                "conv1": _init_conv(next(keys), planes, in_planes, 3),
                "bn1": (jnp.ones(planes, jnp.float32), jnp.zeros(planes, jnp.float32)),
                "conv2": _init_conv(next(keys), planes, planes, 3),
                "bn2": (jnp.ones(planes, jnp.float32), jnp.zeros(planes, jnp.float32)),
            }
            if s != 1 or in_planes != planes:   # BasicBlock.expansion == 1
                blk["shortcut_conv"] = _init_conv(next(keys), planes, in_planes, 1)
                blk["shortcut_bn"] = (jnp.ones(planes, jnp.float32),
                                      jnp.zeros(planes, jnp.float32))
            blocks.append(blk)
            in_planes = planes
        layers.append(blocks)
    params["layers"] = layers
    params["linear_w"] = (jax.random.normal(next(keys), (num_classes, 512), jnp.float32)
                          * (1.0 / math.sqrt(512)))
    params["linear_b"] = jnp.zeros(num_classes, jnp.float32)
    return params


# ----------------------------------------------------------------------------
# Forward pass
# ----------------------------------------------------------------------------

def basic_block(x, blk):
    N, H, W, C = x.shape
    s = blk["stride"]
    y1, st1, (n, ho, wo) = conv3x3_bnstats(x, blk["conv1"], s)
    h1 = bn_finalize(y1, st1, *blk["bn1"], relu=True)          # (M, planes) bf16
    y2, st2, _ = conv3x3_bnstats(h1.reshape(n, ho, wo, -1), blk["conv2"], 1)
    if "shortcut_conv" in blk:
        sc, st_sc, _ = conv1x1_bnstats(x, blk["shortcut_conv"], s)
        res_bn = {"stats": st_sc,
                  "gamma": blk["shortcut_bn"][0],
                  "beta": blk["shortcut_bn"][1]}
        out = bn_finalize(y2, st2, *blk["bn2"], relu=True,
                          residual=sc, residual_bn=res_bn)
    else:
        out = bn_finalize(y2, st2, *blk["bn2"], relu=True,
                          residual=x.reshape(N * H * W, C))
    return out.reshape(n, ho, wo, -1)


def resnet_forward(params, x_nchw):
    x = jnp.transpose(x_nchw, (0, 2, 3, 1)).astype(jnp.bfloat16)  # NCHW -> NHWC
    y, st, (n, ho, wo) = conv3x3_bnstats(x, params["conv1"], 1)
    out = bn_finalize(y, st, *params["bn1"], relu=True).reshape(n, ho, wo, -1)
    for blocks in params["layers"]:
        for blk in blocks:
            out = basic_block(out, blk)
    N, H, W, C = out.shape
    # F.avg_pool2d(out, 4): with a 32x32 CIFAR input the feature map is 4x4,
    # so this is a global average over the 4x4 window.
    assert H == 4 and W == 4, "forward assumes 32x32 input (CIFAR-10)"
    num_classes = params["linear_w"].shape[0]
    logits = pl.pallas_call(
        _pool_linear_kernel,
        out_shape=jax.ShapeDtypeStruct((N, num_classes), jnp.float32),
    )(out.reshape(N, H * W, C),
      params["linear_w"].T.astype(jnp.float32),
      params["linear_b"].reshape(1, -1))
    return logits


# ----------------------------------------------------------------------------

if __name__ == "__main__":
    key = jax.random.PRNGKey(0)
    pkey, xkey = jax.random.split(key)
    params = make_params(pkey, num_blocks=(2, 2, 2, 2), num_classes=10)
    # CIFAR-10 sized input (NCHW like the PyTorch module), small batch.
    x = jax.random.normal(xkey, (2, 3, 32, 32), jnp.float32)
    logits = resnet_forward(params, x)
    logits = jax.block_until_ready(logits)
    assert logits.shape == (2, 10) and logits.dtype == jnp.float32
    assert bool(jnp.all(jnp.isfinite(logits)))
    print("KERNEL_OK")
</pallas_src>

<mosaic_0001>
module attributes {stable_mosaic.version = 11 : i64} {
  func.func @_matmul_stats_kernel(%arg0: i32, %arg1: i32, %arg2: memref<512x27xbf16, #tpu.memory_space<vmem>>, %arg3: memref<27x64xbf16, #tpu.memory_space<vmem>>, %arg4: memref<512x64xbf16, #tpu.memory_space<vmem>>, %arg5: memref<1x64xf32, #tpu.memory_space<vmem>>, %arg6: memref<1x64xf32, #tpu.memory_space<vmem>>, %arg7: memref<8x64xf32, #tpu.memory_space<vmem>>, %arg8: memref<8x64xf32, #tpu.memory_space<vmem>>) attributes {dimension_semantics = [#tpu.dimension_semantics<parallel>, #tpu.dimension_semantics<arbitrary>], iteration_bounds = array<i64: 1, 4>, scalar_prefetch = 0 : i64, scratch_operands = 2 : i64, tpu.core_type = #tpu.core_type<tc>, window_params = [{transform_indices = @transform_0, window_bounds = array<i64: 512, 27>}, {transform_indices = @transform_1, window_bounds = array<i64: 27, 64>}, {transform_indices = @transform_2, window_bounds = array<i64: 512, 64>}, {transform_indices = @transform_3, window_bounds = array<i64: 1, 64>}, {transform_indices = @transform_4, window_bounds = array<i64: 1, 64>}]} {
    %c0 = arith.constant 0 : index
    %c0_0 = arith.constant 0 : index
    %0 = vector.load %arg2[%c0, %c0_0] : memref<512x27xbf16, #tpu.memory_space<vmem>>, vector<512x27xbf16>
    %c0_1 = arith.constant 0 : index
    %c0_2 = arith.constant 0 : index
    %1 = vector.load %arg3[%c0_1, %c0_2] : memref<27x64xbf16, #tpu.memory_space<vmem>>, vector<27x64xbf16>
    %cst = arith.constant dense<0.000000e+00> : vector<512x64xf32>
    %2 = tpu.matmul %0, %1, %cst {dimension_numbers = #tpu.dot_dimension_numbers<[1], [0], [0], [1], [0, 0, 1, 1], [], []>} : vector<512x27xbf16>, vector<27x64xbf16>, vector<512x64xf32> -> vector<512x64xf32>
    %3 = arith.truncf %2 : vector<512x64xf32> to vector<512x64xbf16>
    %c0_3 = arith.constant 0 : index
    %c0_4 = arith.constant 0 : index
    %4 = vector.load %arg4[%c0_3, %c0_4] : memref<512x64xbf16, #tpu.memory_space<vmem>>, vector<512x64xbf16>
    tpu.vector_store %arg4[%c0_3, %c0_4], %3 {strides = array<i32>} : memref<512x64xbf16, #tpu.memory_space<vmem>>, vector<512x64xbf16>,
    %c0_i32 = arith.constant 0 : i32
    %5 = arith.cmpi eq, %arg1, %c0_i32 : i32
    %6 = arith.extui %5 : i1 to i32
    %c0_i32_5 = arith.constant 0 : i32
    %7 = arith.cmpi ne, %6, %c0_i32_5 : i32
    scf.if %7 {
      %cst_17 = arith.constant 0.000000e+00 : f32
      %21 = vector.broadcast %cst_17 : f32 to vector<8x64xf32>
      %c0_18 = arith.constant 0 : index
      %c0_19 = arith.constant 0 : index
      %22 = vector.load %arg7[%c0_18, %c0_19] : memref<8x64xf32, #tpu.memory_space<vmem>>, vector<8x64xf32>
      tpu.vector_store %arg7[%c0_18, %c0_19], %21 {strides = array<i32>} : memref<8x64xf32, #tpu.memory_space<vmem>>, vector<8x64xf32>,
      %cst_20 = arith.constant 0.000000e+00 : f32
      %23 = vector.broadcast %cst_20 : f32 to vector<8x64xf32>
      %c0_21 = arith.constant 0 : index
      %c0_22 = arith.constant 0 : index
      %24 = vector.load %arg8[%c0_21, %c0_22] : memref<8x64xf32, #tpu.memory_space<vmem>>, vector<8x64xf32>
      tpu.vector_store %arg8[%c0_21, %c0_22], %23 {strides = array<i32>} : memref<8x64xf32, #tpu.memory_space<vmem>>, vector<8x64xf32>,
    } else {
    }
    %8 = vector.shape_cast %2 : vector<512x64xf32> to vector<64x8x64xf32>
    %c0_6 = arith.constant 0 : index
    %c0_7 = arith.constant 0 : index
    %9 = vector.load %arg7[%c0_6, %c0_7] : memref<8x64xf32, #tpu.memory_space<vmem>>, vector<8x64xf32>
    %cst_8 = arith.constant dense<0.000000e+00> : vector<8x64xf32>
    %10 = vector.multi_reduction <add>, %8, %cst_8 [0] : vector<64x8x64xf32> to vector<8x64xf32>
    %11 = arith.addf %9, %10 : vector<8x64xf32>
    %c0_9 = arith.constant 0 : index
    %c0_10 = arith.constant 0 : index
    %12 = vector.load %arg7[%c0_9, %c0_10] : memref<8x64xf32, #tpu.memory_space<vmem>>, vector<8x64xf32>
    tpu.vector_store %arg7[%c0_9, %c0_10], %11 {strides = array<i32>} : memref<8x64xf32, #tpu.memory_space<vmem>>, vector<8x64xf32>,
    %c0_11 = arith.constant 0 : index
    %c0_12 = arith.constant 0 : index
    %13 = vector.load %arg8[%c0_11, %c0_12] : memref<8x64xf32, #tpu.memory_space<vmem>>, vector<8x64xf32>
    %14 = arith.mulf %8, %8 : vector<64x8x64xf32>
    %cst_13 = arith.constant dense<0.000000e+00> : vector<8x64xf32>
    %15 = vector.multi_reduction <add>, %14, %cst_13 [0] : vector<64x8x64xf32> to vector<8x64xf32>
    %16 = arith.addf %13, %15 : vector<8x64xf32>
    %c0_14 = arith.constant 0 : index
    %c0_15 = arith.constant 0 : index
    %17 = vector.load %arg8[%c0_14, %c0_15] : memref<8x64xf32, #tpu.memory_space<vmem>>, vector<8x64xf32>
    tpu.vector_store %arg8[%c0_14, %c0_15], %16 {strides = array<i32>} : memref<8x64xf32, #tpu.memory_space<vmem>>, vector<8x64xf32>,
    %c3_i32 = arith.constant 3 : i32
    %18 = arith.cmpi eq, %arg1, %c3_i32 : i32
    %19 = arith.extui %18 : i1 to i32
    %c0_i32_16 = arith.constant 0 : i32
    %20 = arith.cmpi ne, %19, %c0_i32_16 : i32
    scf.if %20 {
      %c0_17 = arith.constant 0 : index
      %c0_18 = arith.constant 0 : index
      %21 = vector.load %arg7[%c0_17, %c0_18] : memref<8x64xf32, #tpu.memory_space<vmem>>, vector<8x64xf32>
      %cst_19 = arith.constant dense<0.000000e+00> : vector<64xf32>
      %22 = vector.multi_reduction <add>, %21, %cst_19 [0] : vector<8x64xf32> to vector<64xf32>
      %23 = vector.shape_cast %22 : vector<64xf32> to vector<1x64xf32>
      %c0_20 = arith.constant 0 : index
      %c0_21 = arith.constant 0 : index
      %24 = vector.load %arg5[%c0_20, %c0_21] : memref<1x64xf32, #tpu.memory_space<vmem>>, vector<1x64xf32>
      tpu.vector_store %arg5[%c0_20, %c0_21], %23 {strides = array<i32>} : memref<1x64xf32, #tpu.memory_space<vmem>>, vector<1x64xf32>,
      %c0_22 = arith.constant 0 : index
      %c0_23 = arith.constant 0 : index
      %25 = vector.load %arg8[%c0_22, %c0_23] : memref<8x64xf32, #tpu.memory_space<vmem>>, vector<8x64xf32>
      %cst_24 = arith.constant dense<0.000000e+00> : vector<64xf32>
      %26 = vector.multi_reduction <add>, %25, %cst_24 [0] : vector<8x64xf32> to vector<64xf32>
      %27 = vector.shape_cast %26 : vector<64xf32> to vector<1x64xf32>
      %c0_25 = arith.constant 0 : index
      %c0_26 = arith.constant 0 : index
      %28 = vector.load %arg6[%c0_25, %c0_26] : memref<1x64xf32, #tpu.memory_space<vmem>>, vector<1x64xf32>
      tpu.vector_store %arg6[%c0_25, %c0_26], %27 {strides = array<i32>} : memref<1x64xf32, #tpu.memory_space<vmem>>, vector<1x64xf32>,
    } else {
    }
    return
  }
  func.func @transform_0(%arg0: i32, %arg1: i32) -> (i32, i32) {
    %c0_i32 = arith.constant 0 : i32
    %c0_i32_0 = arith.constant 0 : i32
    return %arg1, %c0_i32 : i32, i32
  }
  func.func @transform_1(%arg0: i32, %arg1: i32) -> (i32, i32) {
    %c0_i32 = arith.constant 0 : i32
    %c0_i32_0 = arith.constant 0 : i32
    return %c0_i32, %arg0 : i32, i32
  }
  func.func @transform_2(%arg0: i32, %arg1: i32) -> (i32, i32) {
    %c0_i32 = arith.constant 0 : i32
    return %arg1, %arg0 : i32, i32
  }
  func.func @transform_3(%arg0: i32, %arg1: i32) -> (i32, i32) {
    %c0_i32 = arith.constant 0 : i32
    %c0_i32_0 = arith.constant 0 : i32
    return %c0_i32, %arg0 : i32, i32
  }
  func.func @transform_4(%arg0: i32, %arg1: i32) -> (i32, i32) {
    %c0_i32 = arith.constant 0 : i32
    %c0_i32_0 = arith.constant 0 : i32
    return %c0_i32, %arg0 : i32, i32
  }
}

</mosaic_0001>

<llo_original>
// kernel: tpu_custom_call.1
$region0: #{tpu_custom_call.1}
  #allocation0 [shape = 'u32[]', space=smem, size = 0x4, offset = 0x4, fixed_abs, tag = 'smem constant byte address 0x4 - core index']
  #allocation1 [shape = 'u32[144,128]{1,0:T(1,128)}', space=vmem, size = 0x12000, scoped, tag = 'internal scratch']
  #allocation2 [shape = 'f32[8,64]{1,0:T(8,128)}', space=vmem, size = 0x1000, scoped, tag = 'scratch operand']
  #allocation3 [shape = 'f32[8,64]{1,0:T(8,128)}', space=vmem, size = 0x1000, scoped, tag = 'scratch operand']
  %s0 = inlined_call_operand.vmem [shape: bf16[2048,27], index: 0, kind: input, shape index: {}]
  %s1 = inlined_call_operand.vmem [shape: bf16[27,64], index: 1, kind: input, shape index: {}]
  %s2 = inlined_call_operand.vmem [shape: bf16[2048,64], index: 2, kind: output, shape index: {0}]
  %s3 = inlined_call_operand.hbm [shape: f32[1,64], index: 3, kind: output, shape index: {1}]
  %s4 = inlined_call_operand.hbm [shape: f32[1,64], index: 4, kind: output, shape index: {2}]
  %5 = xla_tuple %s2, %s3, %s4
  %s6 = sld [smem:[#allocation0]]
  $region65: #{tpu_custom_call.1} parent=0
    _
  %s8 = ssub.s32 1, %s6
  %s9 = scalar_select 0, %s8, %s6
  $region1: #{tpu_custom_call.1} parent=0
    #allocation4 [shape = 'u8[512]{0}', space=vmem, size = 0x400, scoped, tag = 'output window, operand 1, single buffered']
    #allocation5 [shape = 's32[2]{0}', space=sflag, size = 0x8, scoped, tag = 'scoped memory for tpu_custom_call.1']
    #allocation6 [shape = 'u8[512]{0}', space=vmem, size = 0x400, scoped, tag = 'output window, operand 2, single buffered']
    #allocation7 [shape = 's32[1]{0}', space=sflag, size = 0x4, scoped, tag = 'scoped memory for tpu_custom_call.1']
    %10 = vsyncpa [#allocation5], 0
    %11 = vsyncpa [#allocation7], 0
    loop: start=0, step=1, limit=6
    $region2: #{tpu_custom_call.1} parent=1 // loop_pre_header
      _
    $region3: #{tpu_custom_call.1} parent=1 // loop_header
      %s13 = sphi 0, %s17
      %p14 = scmp.ge.s32.totalorder %s13, 6
      %s20 = sphi 0, %s32
      %s21 = sphi 0, %s28
      %s22 = sphi 0, %s20
      %s23 = sphi 0, %s21
      %s24 = sphi 0, %s22
      %s25 = sphi 0, %s23
      %s35 = sphi 0, %s37
      %s38 = sphi 0, %s35
      %s39 = sphi 0, %s38
      %s55 = sphi 0, %s39
      %s61 = sphi 0, %s63
      %s64 = sphi 0, %s61
      %s65 = sphi 0, %s64
      %s81 = sphi 0, %s65
      %s89 = sphi 0, %s91
      %s92 = sphi 0, %s89
      %s93 = sphi 0, %s92
      %s109 = sphi 0, %s93
      %s115 = sphi 0, %s117
      %s118 = sphi 0, %s115
      %s119 = sphi 0, %s118
      %s135 = sphi 0, %s119
      %s141 = sphi 0, %s143
      %s144 = sphi 0, %s141
      %s145 = sphi 0, %s144
      %s161 = sphi 0, %s145
    $region4: #{tpu_custom_call.1} parent=1 // loop_header_branch
      %16 = sbr.rel (%p14) target = $region8
    $region5: #{tpu_custom_call.1} parent=1 // loop_body
      %s18 = ssub.s32 %s13, 1
      %s19 = ssub.s32 %s13, 2
      %s26 = sadd.s32 1, %s21
      %p27 = scmp.ge.s32.totalorder %s26, 4
      %s28 = scalar_select %p27, 0, %s26
      %s29 = sadd.s32 1, %s20
      %s30 = scalar_select %p27, %s29, %s20
      %p31 = scmp.ge.s32.totalorder %s30, 1
      %s32 = scalar_select %p31, 0, %s30
      %s33 = ssub.s32 %s21, %s28
      %p34 = scmp.eq.s32.totalorder %s33, 0
      %s36 = sadd.s32 %s35, 1
      %s37 = scalar_select %p34, %s35, %s36
      %p40 = pneg %p34
      %p41 = scmp.eq.s32.totalorder %s13, 3
      %p42 = por %p40, %p41
      %p43 = scmp.ne.s32.totalorder %s35, %s38
      %p44 = scmp.eq.s32.totalorder %s13, 0
      %p45 = por %p43, %p44
      %p46 = scmp.ne.s32.totalorder %s35, %s38
      %p47 = scmp.eq.s32.totalorder %s18, 3
      %p48 = por %p46, %p47
      %p49 = scmp.ne.s32.totalorder %s38, %s39
      %p50 = scmp.eq.s32.totalorder %s18, 0
      %p51 = por %p49, %p50
      %p52 = scmp.ne.s32.totalorder %s38, %s39
      %p53 = scmp.eq.s32.totalorder %s19, 3
      %p54 = por %p52, %p53
      %p56 = scmp.ne.s32.totalorder %s39, %s55
      %p57 = scmp.eq.s32.totalorder %s19, 0
      %p58 = por %p56, %p57
      %s59 = ssub.s32 %s20, %s32
      %p60 = scmp.eq.s32.totalorder %s59, 0
      %s62 = sadd.s32 %s61, 1
      %s63 = scalar_select %p60, %s61, %s62
      %p66 = pneg %p60
      %p67 = scmp.eq.s32.totalorder %s13, 3
      %p68 = por %p66, %p67
      %p69 = scmp.ne.s32.totalorder %s61, %s64
      %p70 = scmp.eq.s32.totalorder %s13, 0
      %p71 = por %p69, %p70
      %p72 = scmp.ne.s32.totalorder %s61, %s64
      %p73 = scmp.eq.s32.totalorder %s18, 3
      %p74 = por %p72, %p73
      %p75 = scmp.ne.s32.totalorder %s64, %s65
      %p76 = scmp.eq.s32.totalorder %s18, 0
      %p77 = por %p75, %p76
      %p78 = scmp.ne.s32.totalorder %s64, %s65
      %p79 = scmp.eq.s32.totalorder %s19, 3
      %p80 = por %p78, %p79
      %p82 = scmp.ne.s32.totalorder %s65, %s81
      %p83 = scmp.eq.s32.totalorder %s19, 0
      %p84 = por %p82, %p83
      %s85 = ssub.s32 %s21, %s28
      %s86 = ssub.s32 %s20, %s32
      %s87 = sor.u32 %s85, %s86
      %p88 = scmp.eq.s32.totalorder %s87, 0
      %s90 = sadd.s32 %s89, 1
      %s91 = scalar_select %p88, %s89, %s90
      %p94 = pneg %p88
      %p95 = scmp.eq.s32.totalorder %s13, 3
      %p96 = por %p94, %p95
      %p97 = scmp.ne.s32.totalorder %s89, %s92
      %p98 = scmp.eq.s32.totalorder %s13, 0
      %p99 = por %p97, %p98
      %p100 = scmp.ne.s32.totalorder %s89, %s92
      %p101 = scmp.eq.s32.totalorder %s18, 3
      %p102 = por %p100, %p101
      %p103 = scmp.ne.s32.totalorder %s92, %s93
      %p104 = scmp.eq.s32.totalorder %s18, 0
      %p105 = por %p103, %p104
      %p106 = scmp.ne.s32.totalorder %s92, %s93
      %p107 = scmp.eq.s32.totalorder %s19, 3
      %p108 = por %p106, %p107
      %p110 = scmp.ne.s32.totalorder %s93, %s109
      %p111 = scmp.eq.s32.totalorder %s19, 0
      %p112 = por %p110, %p111
      %s113 = ssub.s32 %s20, %s32
      %p114 = scmp.eq.s32.totalorder %s113, 0
      %s116 = sadd.s32 %s115, 1
      %s117 = scalar_select %p114, %s115, %s116
      %p120 = pneg %p114
      %p121 = scmp.eq.s32.totalorder %s13, 3
      %p122 = por %p120, %p121
      %p123 = scmp.ne.s32.totalorder %s115, %s118
      %p124 = scmp.eq.s32.totalorder %s13, 0
      %p125 = por %p123, %p124
      %p126 = scmp.ne.s32.totalorder %s115, %s118
      %p127 = scmp.eq.s32.totalorder %s18, 3
      %p128 = por %p126, %p127
      %p129 = scmp.ne.s32.totalorder %s118, %s119
      %p130 = scmp.eq.s32.totalorder %s18, 0
      %p131 = por %p129, %p130
      %p132 = scmp.ne.s32.totalorder %s118, %s119
      %p133 = scmp.eq.s32.totalorder %s19, 3
      %p134 = por %p132, %p133
      %p136 = scmp.ne.s32.totalorder %s119, %s135
      %p137 = scmp.eq.s32.totalorder %s19, 0
      %p138 = por %p136, %p137
      %s139 = ssub.s32 %s20, %s32
      %p140 = scmp.eq.s32.totalorder %s139, 0
      %s142 = sadd.s32 %s141, 1
      %s143 = scalar_select %p140, %s141, %s142
      %p146 = pneg %p140
      %p147 = scmp.eq.s32.totalorder %s13, 3
      %p148 = por %p146, %p147
      %p149 = scmp.ne.s32.totalorder %s141, %s144
      %p150 = scmp.eq.s32.totalorder %s13, 0
      %p151 = por %p149, %p150
      %p152 = scmp.ne.s32.totalorder %s141, %s144
      %p153 = scmp.eq.s32.totalorder %s18, 3
      %p154 = por %p152, %p153
      %p155 = scmp.ne.s32.totalorder %s144, %s145
      %p156 = scmp.eq.s32.totalorder %s18, 0
      %p157 = por %p155, %p156
      %p158 = scmp.ne.s32.totalorder %s144, %s145
      %p159 = scmp.eq.s32.totalorder %s19, 3
      %p160 = por %p158, %p159
      %p162 = scmp.ne.s32.totalorder %s145, %s161
      %p163 = scmp.eq.s32.totalorder %s19, 0
      %p164 = por %p162, %p163
      %p165 = scmp.le.s32.totalorder 1, %s13
      %p166 = scmp.lt.s32.totalorder %s13, 5
      %p167 = pnand %p165, %p166
      %p168 = pneg %p167
      // Predicated region
      $region9: #{tpu_custom_call.1} parent=5 // pred_check
        _
      $region10: #{tpu_custom_call.1} parent=5 // pred_check_branch
        %170 = sbr.rel (%p167) target = $region12
      $region11: #{tpu_custom_call.1} parent=5 // pred_region
        %s171 = ssub.s32 %s13, 1
        // Predicated region
        $region13: #{tpu_custom_call.1} parent=11 // pred_check
          %p172 = pneg %p77
        $region14: #{tpu_custom_call.1} parent=11 // pred_check_branch
          %174 = sbr.rel (%p172) target = $region16
        $region15: #{tpu_custom_call.1} parent=11 // pred_region
          %p175 = scmp.lt.s32.totalorder %s22, 0
          %s176 = scalar_select %p175, %s22, 0
          %s177 = smul.addr %s176, 4
          %s178 = scalar_lea.vmem %s1, %s177
        $region16: #{tpu_custom_call.1} parent=11 // pred_fallthru
          _
      $region12: #{tpu_custom_call.1} parent=5 // pred_fallthru
        _
      %p179 = scmp.lt.s32.totalorder %s13, 4
      // Predicated region
      $region17: #{tpu_custom_call.1} parent=5 // pred_check
        %p180 = pneg %p179
      $region18: #{tpu_custom_call.1} parent=5 // pred_check_branch
        %182 = sbr.rel (%p180) target = $region20
      $region19: #{tpu_custom_call.1} parent=5 // pred_region
        // Predicated region
        $region21: #{tpu_custom_call.1} parent=19 // pred_check
          %p183 = pneg %p45
        $region22: #{tpu_custom_call.1} parent=19 // pred_check_branch
          %185 = sbr.rel (%p183) target = $region24
        $region23: #{tpu_custom_call.1} parent=19 // pred_region
          %s186 = smul.u32 64, %s21
          %p187 = scmp.lt.s32.totalorder %s186, 255
          %s188 = scalar_select %p187, %s186, 255
          %s189 = smul.addr %s188, 4
          %s190 = scalar_lea.vmem %s0, %s189
          %s191 = smul.u32 64, %s21
        $region24: #{tpu_custom_call.1} parent=19 // pred_fallthru
          _
      $region20: #{tpu_custom_call.1} parent=5 // pred_fallthru
        _
      %p192 = scmp.le.s32.totalorder 1, %s13
      %p193 = scmp.lt.s32.totalorder %s13, 5
      %p194 = pnand %p192, %p193
      %p195 = pneg %p194
      // Predicated region
      $region25: #{tpu_custom_call.1} parent=5 // pred_check
        _
      $region26: #{tpu_custom_call.1} parent=5 // pred_check_branch
        %197 = sbr.rel (%p194) target = $region28
      $region27: #{tpu_custom_call.1} parent=5 // pred_region
        %s198 = ssub.s32 %s13, 1
        %s199 = smul.u32 64, %s23
        %p200 = scmp.lt.s32.totalorder %s199, 255
        %s201 = scalar_select %p200, %s199, 255
        %s202 = smul.addr %s201, 4
        %s203 = scalar_lea.vmem %s0, %s202
        %p204 = pneg %p51
        %p205 = pneg %p48
        %p206 = scmp.lt.s32.totalorder %s22, 0
        %s207 = scalar_select %p206, %s22, 0
        %s208 = smul.addr %s207, 4
        %s209 = scalar_lea.vmem %s1, %s208
        %p210 = pneg %p77
        %p211 = pneg %p74
        %p212 = pneg %p105
        %p213 = pneg %p102
        %s214 = smul.u32 64, %s23
        %p215 = scmp.lt.s32.totalorder %s214, 255
        %s216 = scalar_select %p215, %s214, 255
        %p217 = scmp.lt.s32.totalorder %s22, 0
        %s218 = scalar_select %p217, %s22, 0
        %s219 = sadd.s32 %s218, %s216
        %s220 = smul.addr %s219, 4
        %s221 = scalar_lea.vmem %s2, %s220
        %p222 = pneg %p131
        %p223 = pneg %p128
        %p224 = pneg %p157
        %p225 = pneg %p154
        %s226 = smul.u32 64, %s23
        %p227 = scmp.lt.s32.totalorder %s226, 255
        %s228 = scalar_select %p227, %s226, 255
        %s229 = smul.addr %s228, 4
        %s230 = scalar_lea.vmem %s0, %s229
        %s231 = smul.u32 64, %s23
        %p232 = scmp.lt.s32.totalorder %s22, 0
        %s233 = scalar_select %p232, %s22, 0
        %s234 = smul.addr %s233, 4
        %s235 = scalar_lea.vmem %s1, %s234
        %s236 = smul.u32 64, %s23
        %p237 = scmp.lt.s32.totalorder %s236, 255
        %s238 = scalar_select %p237, %s236, 255
        %p239 = scmp.lt.s32.totalorder %s22, 0
        %s240 = scalar_select %p239, %s22, 0
        %s241 = sadd.s32 %s240, %s238
        %s242 = smul.addr %s241, 4
        %s243 = scalar_lea.vmem %s2, %s242
        %s244 = smul.u32 64, %s23
        %v246 = vld [vmem:[%s230] sm:$0xf]
        %v247 = vld [vmem:[%s230 + $0x4] sm:$0xf]
        %v248 = vld [vmem:[%s230 + $0x8] sm:$0xf]
        %v249 = vld [vmem:[%s230 + $0xc] sm:$0xf]
        %v250 = vld [vmem:[%s230 + $0x10] sm:$0xf]
        %v251 = vld [vmem:[%s230 + $0x14] sm:$0xf]
        %v252 = vld [vmem:[%s230 + $0x18] sm:$0xf]
        %v253 = vld [vmem:[%s230 + $0x1c] sm:$0xf]
        %v254 = vld [vmem:[%s230 + $0x20] sm:$0xf]
        %v255 = vld [vmem:[%s230 + $0x24] sm:$0xf]
        %v256 = vld [vmem:[%s230 + $0x28] sm:$0xf]
        %v257 = vld [vmem:[%s230 + $0x2c] sm:$0xf]
        %v258 = vld [vmem:[%s230 + $0x30] sm:$0xf]
        %v259 = vld [vmem:[%s230 + $0x34] sm:$0xf]
        %v260 = vld [vmem:[%s230 + $0x38] sm:$0xf]
        %v261 = vld [vmem:[%s230 + $0x3c] sm:$0xf]
        %v262 = vld [vmem:[%s230 + $0x40] sm:$0xf]
        %v263 = vld [vmem:[%s230 + $0x44] sm:$0xf]
        %v264 = vld [vmem:[%s230 + $0x48] sm:$0xf]
        %v265 = vld [vmem:[%s230 + $0x4c] sm:$0xf]
        %v266 = vld [vmem:[%s230 + $0x50] sm:$0xf]
        %v267 = vld [vmem:[%s230 + $0x54] sm:$0xf]
        %v268 = vld [vmem:[%s230 + $0x58] sm:$0xf]
        %v269 = vld [vmem:[%s230 + $0x5c] sm:$0xf]
        %v270 = vld [vmem:[%s230 + $0x60] sm:$0xf]
        %v271 = vld [vmem:[%s230 + $0x64] sm:$0xf]
        %v272 = vld [vmem:[%s230 + $0x68] sm:$0xf]
        %v273 = vld [vmem:[%s230 + $0x6c] sm:$0xf]
        %v274 = vld [vmem:[%s230 + $0x70] sm:$0xf]
        %v275 = vld [vmem:[%s230 + $0x74] sm:$0xf]
        %v276 = vld [vmem:[%s230 + $0x78] sm:$0xf]
        %v277 = vld [vmem:[%s230 + $0x7c] sm:$0xf]
        %v278 = vld [vmem:[%s230 + $0x80] sm:$0xf]
        %v279 = vld [vmem:[%s230 + $0x84] sm:$0xf]
        %v280 = vld [vmem:[%s230 + $0x88] sm:$0xf]
        %v281 = vld [vmem:[%s230 + $0x8c] sm:$0xf]
        %v282 = vld [vmem:[%s230 + $0x90] sm:$0xf]
        %v283 = vld [vmem:[%s230 + $0x94] sm:$0xf]
        %v284 = vld [vmem:[%s230 + $0x98] sm:$0xf]
        %v285 = vld [vmem:[%s230 + $0x9c] sm:$0xf]
        %v286 = vld [vmem:[%s230 + $0xa0] sm:$0xf]
        %v287 = vld [vmem:[%s230 + $0xa4] sm:$0xf]
        %v288 = vld [vmem:[%s230 + $0xa8] sm:$0xf]
        %v289 = vld [vmem:[%s230 + $0xac] sm:$0xf]
        %v290 = vld [vmem:[%s230 + $0xb0] sm:$0xf]
        %v291 = vld [vmem:[%s230 + $0xb4] sm:$0xf]
        %v292 = vld [vmem:[%s230 + $0xb8] sm:$0xf]
        %v293 = vld [vmem:[%s230 + $0xbc] sm:$0xf]
        %v294 = vld [vmem:[%s230 + $0xc0] sm:$0xf]
        %v295 = vld [vmem:[%s230 + $0xc4] sm:$0xf]
        %v296 = vld [vmem:[%s230 + $0xc8] sm:$0xf]
        %v297 = vld [vmem:[%s230 + $0xcc] sm:$0xf]
        %v298 = vld [vmem:[%s230 + $0xd0] sm:$0xf]
        %v299 = vld [vmem:[%s230 + $0xd4] sm:$0xf]
        %v300 = vld [vmem:[%s230 + $0xd8] sm:$0xf]
        %v301 = vld [vmem:[%s230 + $0xdc] sm:$0xf]
        %v302 = vld [vmem:[%s230 + $0xe0] sm:$0xf]
        %v303 = vld [vmem:[%s230 + $0xe4] sm:$0xf]
        %v304 = vld [vmem:[%s230 + $0xe8] sm:$0xf]
        %v305 = vld [vmem:[%s230 + $0xec] sm:$0xf]
        %v306 = vld [vmem:[%s230 + $0xf0] sm:$0xf]
        %v307 = vld [vmem:[%s230 + $0xf4] sm:$0xf]
        %v308 = vld [vmem:[%s230 + $0xf8] sm:$0xf]
        %v309 = vld [vmem:[%s230 + $0xfc] sm:$0xf]
        %v310 = vld [vmem:[%s235] sm:$0xf]
        %v311 = vld [vmem:[%s235 + $0x4] sm:$0xf]
        %v312 = vld [vmem:[%s235 + $0x8] sm:$0xf]
        %v313 = vld [vmem:[%s235 + $0xc] sm:$0x3]
        %v378 = vunpack.c.l.b16 %v246
        %v379 = vunpack.c.l.b16 %v247
        %v380 = vunpack.c.l.b16 %v248
        %v381 = vunpack.c.l.b16 %v249
        %v382 = vunpack.c.l.b16 %v250
        %v383 = vunpack.c.l.b16 %v251
        %v384 = vunpack.c.l.b16 %v252
        %v385 = vunpack.c.l.b16 %v253
        %v386 = vunpack.c.l.b16 %v254
        %v387 = vunpack.c.l.b16 %v255
        %v388 = vunpack.c.l.b16 %v256
        %v389 = vunpack.c.l.b16 %v257
        %v390 = vunpack.c.l.b16 %v258
        %v391 = vunpack.c.l.b16 %v259
        %v392 = vunpack.c.l.b16 %v260
        %v393 = vunpack.c.l.b16 %v261
        %v394 = vunpack.c.l.b16 %v262
        %v395 = vunpack.c.l.b16 %v263
        %v396 = vunpack.c.l.b16 %v264
        %v397 = vunpack.c.l.b16 %v265
        %v398 = vunpack.c.l.b16 %v266
        %v399 = vunpack.c.l.b16 %v267
        %v400 = vunpack.c.l.b16 %v268
        %v401 = vunpack.c.l.b16 %v269
        %v402 = vunpack.c.l.b16 %v270
        %v403 = vunpack.c.l.b16 %v271
        %v404 = vunpack.c.l.b16 %v272
        %v405 = vunpack.c.l.b16 %v273
        %v406 = vunpack.c.l.b16 %v274
        %v407 = vunpack.c.l.b16 %v275
        %v408 = vunpack.c.l.b16 %v276
        %v409 = vunpack.c.l.b16 %v277
        %v410 = vunpack.c.l.b16 %v278
        %v411 = vunpack.c.l.b16 %v279
        %v412 = vunpack.c.l.b16 %v280
        %v413 = vunpack.c.l.b16 %v281
        %v414 = vunpack.c.l.b16 %v282
        %v415 = vunpack.c.l.b16 %v283
        %v416 = vunpack.c.l.b16 %v284
        %v417 = vunpack.c.l.b16 %v285
        %v418 = vunpack.c.l.b16 %v286
        %v419 = vunpack.c.l.b16 %v287
        %v420 = vunpack.c.l.b16 %v288
        %v421 = vunpack.c.l.b16 %v289
        %v422 = vunpack.c.l.b16 %v290
        %v423 = vunpack.c.l.b16 %v291
        %v424 = vunpack.c.l.b16 %v292
        %v425 = vunpack.c.l.b16 %v293
        %v426 = vunpack.c.l.b16 %v294
        %v427 = vunpack.c.l.b16 %v295
        %v428 = vunpack.c.l.b16 %v296
        %v429 = vunpack.c.l.b16 %v297
        %v430 = vunpack.c.l.b16 %v298
        %v431 = vunpack.c.l.b16 %v299
        %v432 = vunpack.c.l.b16 %v300
        %v433 = vunpack.c.l.b16 %v301
        %v434 = vunpack.c.l.b16 %v302
        %v435 = vunpack.c.l.b16 %v303
        %v436 = vunpack.c.l.b16 %v304
        %v437 = vunpack.c.l.b16 %v305
        %v438 = vunpack.c.l.b16 %v306
        %v439 = vunpack.c.l.b16 %v307
        %v440 = vunpack.c.l.b16 %v308
        %v441 = vunpack.c.l.b16 %v309
        %v442 = vpack.c.b16 %v379, %v378
        %v443 = vpack.c.b16 %v381, %v380
        %v444 = vpack.c.b16 %v383, %v382
        %v445 = vpack.c.b16 %v385, %v384
        %v446 = vpack.c.b16 %v387, %v386
        %v447 = vpack.c.b16 %v389, %v388
        %v448 = vpack.c.b16 %v391, %v390
        %v449 = vpack.c.b16 %v393, %v392
        %v450 = vpack.c.b16 %v395, %v394
        %v451 = vpack.c.b16 %v397, %v396
        %v452 = vpack.c.b16 %v399, %v398
        %v453 = vpack.c.b16 %v401, %v400
        %v454 = vpack.c.b16 %v403, %v402
        %v455 = vpack.c.b16 %v405, %v404
        %v456 = vpack.c.b16 %v407, %v406
        %v457 = vpack.c.b16 %v409, %v408
        %v458 = vpack.c.b16 %v411, %v410
        %v459 = vpack.c.b16 %v413, %v412
        %v460 = vpack.c.b16 %v415, %v414
        %v461 = vpack.c.b16 %v417, %v416
        %v462 = vpack.c.b16 %v419, %v418
        %v463 = vpack.c.b16 %v421, %v420
        %v464 = vpack.c.b16 %v423, %v422
        %v465 = vpack.c.b16 %v425, %v424
        %v466 = vpack.c.b16 %v427, %v426
        %v467 = vpack.c.b16 %v429, %v428
        %v468 = vpack.c.b16 %v431, %v430
        %v469 = vpack.c.b16 %v433, %v432
        %v470 = vpack.c.b16 %v435, %v434
        %v471 = vpack.c.b16 %v437, %v436
        %v472 = vpack.c.b16 %v439, %v438
        %v473 = vpack.c.b16 %v441, %v440
        %v478 = vunpack.c.l.b16 %v310
        %v479 = vunpack.c.l.b16 %v311
        %v480 = vunpack.c.l.b16 %v312
        %v481 = vunpack.c.l.b16 %v313
        %v482 = vpack.c.b16 %v479, %v478
        %v483 = vpack.c.b16 %v481, %v480
        %vm485 = vcmask 220160
        %v487 = vsel %vm485, %v442, 0
        %v490 = vsel %vm485, %v443, 0
        %v493 = vsel %vm485, %v444, 0
        %v496 = vsel %vm485, %v445, 0
        %v499 = vsel %vm485, %v446, 0
        %v502 = vsel %vm485, %v447, 0
        %v505 = vsel %vm485, %v448, 0
        %v508 = vsel %vm485, %v449, 0
        %v511 = vsel %vm485, %v450, 0
        %v514 = vsel %vm485, %v451, 0
        %v517 = vsel %vm485, %v452, 0
        %v520 = vsel %vm485, %v453, 0
        %v523 = vsel %vm485, %v454, 0
        %v526 = vsel %vm485, %v455, 0
        %v529 = vsel %vm485, %v456, 0
        %v532 = vsel %vm485, %v457, 0
        %v535 = vsel %vm485, %v458, 0
        %v538 = vsel %vm485, %v459, 0
        %v541 = vsel %vm485, %v460, 0
        %v544 = vsel %vm485, %v461, 0
        %v547 = vsel %vm485, %v462, 0
        %v550 = vsel %vm485, %v463, 0
        %v553 = vsel %vm485, %v464, 0
        %v556 = vsel %vm485, %v465, 0
        %v559 = vsel %vm485, %v466, 0
        %v562 = vsel %vm485, %v467, 0
        %v565 = vsel %vm485, %v468, 0
        %v568 = vsel %vm485, %v469, 0
        %v571 = vsel %vm485, %v470, 0
        %v574 = vsel %vm485, %v471, 0
        %v577 = vsel %vm485, %v472, 0
        %v580 = vsel %vm485, %v473, 0
        %vm582 = vcmask 1044480
        %vm583 = vcmask 1045504
        %v584 = vsel %vm582, 4294967295, 65535
        %v585 = vsel %vm583, %v584, 0
        %v587 = vand.u32 %v483, %v585
        %589 = vmatprep.subr.bf16.mxu0 0
        %590 = vmatpush1.bf16.msra.mxu0 0
        %591 = vmatprep.subr.bf16.mxu0 0
        %592 = vmatpush1.bf16.msra.mxu0 0
        %593 = vmatprep.subr.bf16.mxu0 0
        %594 = vmatpush1.bf16.msra.mxu0 0
        %595 = vmatprep.subr.bf16.mxu0 0
        %596 = vmatpush1.bf16.msra.mxu0 0
        %597 = vmatprep.subr.bf16.mxu0 0
        %598 = vmatpush1.bf16.msra.mxu0 0
        %599 = vmatprep.subr.bf16.mxu0 0
        %600 = vmatpush1.bf16.msra.mxu0 0
        %601 = vmatprep.subr.bf16.mxu0 0
        %602 = vmatpush1.bf16.msra.mxu0 %v587
        %603 = vmatprep.subr.bf16.mxu0 0
        %604 = vmatpush1.bf16.msra.mxu0 %v482
        %605 = vmatprep.subr.bf16.mxu0 0
        %606 = vmatpush2.bf16.msra.mxu0 0
        %607 = vmatprep.subr.bf16.mxu0 0
        %608 = vmatpush2.bf16.msra.mxu0 0
        %609 = vmatprep.subr.bf16.mxu0 0
        %610 = vmatpush2.bf16.msra.mxu0 0
        %611 = vmatprep.subr.bf16.mxu0 0
        %612 = vmatpush2.bf16.msra.mxu0 0
        %613 = vmatprep.subr.bf16.mxu0 0
        %614 = vmatpush2.bf16.msra.mxu0 0
        %615 = vmatprep.subr.bf16.mxu0 0
        %616 = vmatpush2.bf16.msra.mxu0 0
        %617 = vmatprep.subr.bf16.mxu0 0
        %618 = vmatpush2.bf16.msra.mxu0 0
        %619 = vmatprep.subr.bf16.mxu0 0
        %620 = vmatpush2.bf16.msra.mxu0 0
        %621 = vmatprep.mubr.bf16.mxu0 0
        %622 = vmatmul.mubr.bf16.gmra.mxu0 %v487
        %v623 = vpop.f32.mrf.mxu0
        %v624 = vadd.f32 0.0, %v623
        %v625 = vpop.f32.mrf.mxu0
        %v626 = vpop.f32.mrf.mxu0
        %v627 = vadd.f32 0.0, %v626
        %v628 = vpop.f32.mrf.mxu0
        %629 = vmatprep.mubr.bf16.mxu0 0
        %630 = vmatmul.mubr.bf16.gmra.mxu0 %v490
        %v631 = vpop.f32.mrf.mxu0
        %v632 = vadd.f32 0.0, %v631
        %v633 = vpop.f32.mrf.mxu0
        %v634 = vpop.f32.mrf.mxu0
        %v635 = vadd.f32 0.0, %v634
        %v636 = vpop.f32.mrf.mxu0
        %637 = vmatprep.mubr.bf16.mxu0 0
        %638 = vmatmul.mubr.bf16.gmra.mxu0 %v493
        %v639 = vpop.f32.mrf.mxu0
        %v640 = vadd.f32 0.0, %v639
        %v641 = vpop.f32.mrf.mxu0
        %v642 = vpop.f32.mrf.mxu0
        %v643 = vadd.f32 0.0, %v642
        %v644 = vpop.f32.mrf.mxu0
        %645 = vmatprep.mubr.bf16.mxu0 0
        %646 = vmatmul.mubr.bf16.gmra.mxu0 %v496
        %v647 = vpop.f32.mrf.mxu0
        %v648 = vadd.f32 0.0, %v647
        %v649 = vpop.f32.mrf.mxu0
        %v650 = vpop.f32.mrf.mxu0
        %v651 = vadd.f32 0.0, %v650
        %v652 = vpop.f32.mrf.mxu0
        %653 = vmatprep.mubr.bf16.mxu0 0
        %654 = vmatmul.mubr.bf16.gmra.mxu0 %v499
        %v655 = vpop.f32.mrf.mxu0
        %v656 = vadd.f32 0.0, %v655
        %v657 = vpop.f32.mrf.mxu0
        %v658 = vpop.f32.mrf.mxu0
        %v659 = vadd.f32 0.0, %v658
        %v660 = vpop.f32.mrf.mxu0
        %661 = vmatprep.mubr.bf16.mxu0 0
        %662 = vmatmul.mubr.bf16.gmra.mxu0 %v502
        %v663 = vpop.f32.mrf.mxu0
        %v664 = vadd.f32 0.0, %v663
        %v665 = vpop.f32.mrf.mxu0
        %v666 = vpop.f32.mrf.mxu0
        %v667 = vadd.f32 0.0, %v666
        %v668 = vpop.f32.mrf.mxu0
        %669 = vmatprep.mubr.bf16.mxu0 0
        %670 = vmatmul.mubr.bf16.gmra.mxu0 %v505
        %v671 = vpop.f32.mrf.mxu0
        %v672 = vadd.f32 0.0, %v671
        %v673 = vpop.f32.mrf.mxu0
        %v674 = vpop.f32.mrf.mxu0
        %v675 = vadd.f32 0.0, %v674
        %v676 = vpop.f32.mrf.mxu0
        %677 = vmatprep.mubr.bf16.mxu0 0
        %678 = vmatmul.mubr.bf16.gmra.mxu0 %v508
        %v679 = vpop.f32.mrf.mxu0
        %v680 = vadd.f32 0.0, %v679
        %v681 = vpop.f32.mrf.mxu0
        %v682 = vpop.f32.mrf.mxu0
        %v683 = vadd.f32 0.0, %v682
        %v684 = vpop.f32.mrf.mxu0
        %685 = vmatprep.mubr.bf16.mxu0 0
        %686 = vmatmul.mubr.bf16.gmra.mxu0 %v511
        %v687 = vpop.f32.mrf.mxu0
        %v688 = vadd.f32 0.0, %v687
        %v689 = vpop.f32.mrf.mxu0
        %v690 = vpop.f32.mrf.mxu0
        %v691 = vadd.f32 0.0, %v690
        %v692 = vpop.f32.mrf.mxu0
        %693 = vmatprep.mubr.bf16.mxu0 0
        %694 = vmatmul.mubr.bf16.gmra.mxu0 %v514
        %v695 = vpop.f32.mrf.mxu0
        %v696 = vadd.f32 0.0, %v695
        %v697 = vpop.f32.mrf.mxu0
        %v698 = vpop.f32.mrf.mxu0
        %v699 = vadd.f32 0.0, %v698
        %v700 = vpop.f32.mrf.mxu0
        %701 = vmatprep.mubr.bf16.mxu0 0
        %702 = vmatmul.mubr.bf16.gmra.mxu0 %v517
        %v703 = vpop.f32.mrf.mxu0
        %v704 = vadd.f32 0.0, %v703
        %v705 = vpop.f32.mrf.mxu0
        %v706 = vpop.f32.mrf.mxu0
        %v707 = vadd.f32 0.0, %v706
        %v708 = vpop.f32.mrf.mxu0
        %709 = vmatprep.mubr.bf16.mxu0 0
        %710 = vmatmul.mubr.bf16.gmra.mxu0 %v520
        %v711 = vpop.f32.mrf.mxu0
        %v712 = vadd.f32 0.0, %v711
        %v713 = vpop.f32.mrf.mxu0
        %v714 = vpop.f32.mrf.mxu0
        %v715 = vadd.f32 0.0, %v714
        %v716 = vpop.f32.mrf.mxu0
        %717 = vmatprep.mubr.bf16.mxu0 0
        %718 = vmatmul.mubr.bf16.gmra.mxu0 %v523
        %v719 = vpop.f32.mrf.mxu0
        %v720 = vadd.f32 0.0, %v719
        %v721 = vpop.f32.mrf.mxu0
        %v722 = vpop.f32.mrf.mxu0
        %v723 = vadd.f32 0.0, %v722
        %v724 = vpop.f32.mrf.mxu0
        %725 = vmatprep.mubr.bf16.mxu0 0
        %726 = vmatmul.mubr.bf16.gmra.mxu0 %v526
        %v727 = vpop.f32.mrf.mxu0
        %v728 = vadd.f32 0.0, %v727
        %v729 = vpop.f32.mrf.mxu0
        %v730 = vpop.f32.mrf.mxu0
        %v731 = vadd.f32 0.0, %v730
        %v732 = vpop.f32.mrf.mxu0
        %733 = vmatprep.mubr.bf16.mxu0 0
        %734 = vmatmul.mubr.bf16.gmra.mxu0 %v529
        %v735 = vpop.f32.mrf.mxu0
        %v736 = vadd.f32 0.0, %v735
        %v737 = vpop.f32.mrf.mxu0
        %v738 = vpop.f32.mrf.mxu0
        %v739 = vadd.f32 0.0, %v738
        %v740 = vpop.f32.mrf.mxu0
        %741 = vmatprep.mubr.bf16.mxu0 0
        %742 = vmatmul.mubr.bf16.gmra.mxu0 %v532
        %v743 = vpop.f32.mrf.mxu0
        %v744 = vadd.f32 0.0, %v743
        %v745 = vpop.f32.mrf.mxu0
        %v746 = vpop.f32.mrf.mxu0
        %v747 = vadd.f32 0.0, %v746
        %v748 = vpop.f32.mrf.mxu0
        %749 = vmatprep.mubr.bf16.mxu0 0
        %750 = vmatmul.mubr.bf16.gmra.mxu0 %v535
        %v751 = vpop.f32.mrf.mxu0
        %v752 = vadd.f32 0.0, %v751
        %v753 = vpop.f32.mrf.mxu0
        %v754 = vpop.f32.mrf.mxu0
        %v755 = vadd.f32 0.0, %v754
        %v756 = vpop.f32.mrf.mxu0
        %757 = vmatprep.mubr.bf16.mxu0 0
        %758 = vmatmul.mubr.bf16.gmra.mxu0 %v538
        %v759 = vpop.f32.mrf.mxu0
        %v760 = vadd.f32 0.0, %v759
        %v761 = vpop.f32.mrf.mxu0
        %v762 = vpop.f32.mrf.mxu0
        %v763 = vadd.f32 0.0, %v762
        %v764 = vpop.f32.mrf.mxu0
        %765 = vmatprep.mubr.bf16.mxu0 0
        %766 = vmatmul.mubr.bf16.gmra.mxu0 %v541
        %v767 = vpop.f32.mrf.mxu0
        %v768 = vadd.f32 0.0, %v767
        %v769 = vpop.f32.mrf.mxu0
        %v770 = vpop.f32.mrf.mxu0
        %v771 = vadd.f32 0.0, %v770
        %v772 = vpop.f32.mrf.mxu0
        %773 = vmatprep.mubr.bf16.mxu0 0
        %774 = vmatmul.mubr.bf16.gmra.mxu0 %v544
        %v775 = vpop.f32.mrf.mxu0
        %v776 = vadd.f32 0.0, %v775
        %v777 = vpop.f32.mrf.mxu0
        %v778 = vpop.f32.mrf.mxu0
        %v779 = vadd.f32 0.0, %v778
        %v780 = vpop.f32.mrf.mxu0
        %781 = vmatprep.mubr.bf16.mxu0 0
        %782 = vmatmul.mubr.bf16.gmra.mxu0 %v547
        %v783 = vpop.f32.mrf.mxu0
        %v784 = vadd.f32 0.0, %v783
        %v785 = vpop.f32.mrf.mxu0
        %v786 = vpop.f32.mrf.mxu0
        %v787 = vadd.f32 0.0, %v786
        %v788 = vpop.f32.mrf.mxu0
        %789 = vmatprep.mubr.bf16.mxu0 0
        %790 = vmatmul.mubr.bf16.gmra.mxu0 %v550
        %v791 = vpop.f32.mrf.mxu0
        %v792 = vadd.f32 0.0, %v791
        %v793 = vpop.f32.mrf.mxu0
        %v794 = vpop.f32.mrf.mxu0
        %v795 = vadd.f32 0.0, %v794
        %v796 = vpop.f32.mrf.mxu0
        %797 = vmatprep.mubr.bf16.mxu0 0
        %798 = vmatmul.mubr.bf16.gmra.mxu0 %v553
        %v799 = vpop.f32.mrf.mxu0
        %v800 = vadd.f32 0.0, %v799
        %v801 = vpop.f32.mrf.mxu0
        %v802 = vpop.f32.mrf.mxu0
        %v803 = vadd.f32 0.0, %v802
        %v804 = vpop.f32.mrf.mxu0
        %805 = vmatprep.mubr.bf16.mxu0 0
        %806 = vmatmul.mubr.bf16.gmra.mxu0 %v556
        %v807 = vpop.f32.mrf.mxu0
        %v808 = vadd.f32 0.0, %v807
        %v809 = vpop.f32.mrf.mxu0
        %v810 = vpop.f32.mrf.mxu0
        %v811 = vadd.f32 0.0, %v810
        %v812 = vpop.f32.mrf.mxu0
        %813 = vmatprep.mubr.bf16.mxu0 0
        %814 = vmatmul.mubr.bf16.gmra.mxu0 %v559
        %v815 = vpop.f32.mrf.mxu0
        %v816 = vadd.f32 0.0, %v815
        %v817 = vpop.f32.mrf.mxu0
        %v818 = vpop.f32.mrf.mxu0
        %v819 = vadd.f32 0.0, %v818
        %v820 = vpop.f32.mrf.mxu0
        %821 = vmatprep.mubr.bf16.mxu0 0
        %822 = vmatmul.mubr.bf16.gmra.mxu0 %v562
        %v823 = vpop.f32.mrf.mxu0
        %v824 = vadd.f32 0.0, %v823
        %v825 = vpop.f32.mrf.mxu0
        %v826 = vpop.f32.mrf.mxu0
        %v827 = vadd.f32 0.0, %v826
        %v828 = vpop.f32.mrf.mxu0
        %829 = vmatprep.mubr.bf16.mxu0 0
        %830 = vmatmul.mubr.bf16.gmra.mxu0 %v565
        %v831 = vpop.f32.mrf.mxu0
        %v832 = vadd.f32 0.0, %v831
        %v833 = vpop.f32.mrf.mxu0
        %v834 = vpop.f32.mrf.mxu0
        %v835 = vadd.f32 0.0, %v834
        %v836 = vpop.f32.mrf.mxu0
        %837 = vmatprep.mubr.bf16.mxu0 0
        %838 = vmatmul.mubr.bf16.gmra.mxu0 %v568
        %v839 = vpop.f32.mrf.mxu0
        %v840 = vadd.f32 0.0, %v839
        %v841 = vpop.f32.mrf.mxu0
        %v842 = vpop.f32.mrf.mxu0
        %v843 = vadd.f32 0.0, %v842
        %v844 = vpop.f32.mrf.mxu0
        %845 = vmatprep.mubr.bf16.mxu0 0
        %846 = vmatmul.mubr.bf16.gmra.mxu0 %v571
        %v847 = vpop.f32.mrf.mxu0
        %v848 = vadd.f32 0.0, %v847
        %v849 = vpop.f32.mrf.mxu0
        %v850 = vpop.f32.mrf.mxu0
        %v851 = vadd.f32 0.0, %v850
        %v852 = vpop.f32.mrf.mxu0
        %853 = vmatprep.mubr.bf16.mxu0 0
        %854 = vmatmul.mubr.bf16.gmra.mxu0 %v574
        %v855 = vpop.f32.mrf.mxu0
        %v856 = vadd.f32 0.0, %v855
        %v857 = vpop.f32.mrf.mxu0
        %v858 = vpop.f32.mrf.mxu0
        %v859 = vadd.f32 0.0, %v858
        %v860 = vpop.f32.mrf.mxu0
        %861 = vmatprep.mubr.bf16.mxu0 0
        %862 = vmatmul.mubr.bf16.gmra.mxu0 %v577
        %v863 = vpop.f32.mrf.mxu0
        %v864 = vadd.f32 0.0, %v863
        %v865 = vpop.f32.mrf.mxu0
        %v866 = vpop.f32.mrf.mxu0
        %v867 = vadd.f32 0.0, %v866
        %v868 = vpop.f32.mrf.mxu0
        %869 = vmatprep.mubr.bf16.mxu0 0
        %870 = vmatmul.mubr.bf16.gmra.mxu0 %v580
        %v871 = vpop.f32.mrf.mxu0
        %v872 = vadd.f32 0.0, %v871
        %v873 = vpop.f32.mrf.mxu0
        %v874 = vpop.f32.mrf.mxu0
        %v875 = vadd.f32 0.0, %v874
        %v876 = vpop.f32.mrf.mxu0
        %877 = vdwg.mxu0
        %v878 = vpack.c.bf16 %v627, %v624
        %v879 = vpack.c.bf16 %v635, %v632
        %v880 = vpack.c.bf16 %v643, %v640
        %v881 = vpack.c.bf16 %v651, %v648
        %v882 = vpack.c.bf16 %v659, %v656
        %v883 = vpack.c.bf16 %v667, %v664
        %v884 = vpack.c.bf16 %v675, %v672
        %v885 = vpack.c.bf16 %v683, %v680
        %v886 = vpack.c.bf16 %v691, %v688
        %v887 = vpack.c.bf16 %v699, %v696
        %v888 = vpack.c.bf16 %v707, %v704
        %v889 = vpack.c.bf16 %v715, %v712
        %v890 = vpack.c.bf16 %v723, %v720
        %v891 = vpack.c.bf16 %v731, %v728
        %v892 = vpack.c.bf16 %v739, %v736
        %v893 = vpack.c.bf16 %v747, %v744
        %v894 = vpack.c.bf16 %v755, %v752
        %v895 = vpack.c.bf16 %v763, %v760
        %v896 = vpack.c.bf16 %v771, %v768
        %v897 = vpack.c.bf16 %v779, %v776
        %v898 = vpack.c.bf16 %v787, %v784
        %v899 = vpack.c.bf16 %v795, %v792
        %v900 = vpack.c.bf16 %v803, %v800
        %v901 = vpack.c.bf16 %v811, %v808
        %v902 = vpack.c.bf16 %v819, %v816
        %v903 = vpack.c.bf16 %v827, %v824
        %v904 = vpack.c.bf16 %v835, %v832
        %v905 = vpack.c.bf16 %v843, %v840
        %v906 = vpack.c.bf16 %v851, %v848
        %v907 = vpack.c.bf16 %v859, %v856
        %v908 = vpack.c.bf16 %v867, %v864
        %v909 = vpack.c.bf16 %v875, %v872
        %v942 = vunpack.c.l.b16 %v878
        %v943 = vunpack.c.h.b16 %v878
        %v944 = vunpack.c.l.b16 %v879
        %v945 = vunpack.c.h.b16 %v879
        %v946 = vunpack.c.l.b16 %v880
        %v947 = vunpack.c.h.b16 %v880
        %v948 = vunpack.c.l.b16 %v881
        %v949 = vunpack.c.h.b16 %v881
        %v950 = vunpack.c.l.b16 %v882
        %v951 = vunpack.c.h.b16 %v882
        %v952 = vunpack.c.l.b16 %v883
        %v953 = vunpack.c.h.b16 %v883
        %v954 = vunpack.c.l.b16 %v884
        %v955 = vunpack.c.h.b16 %v884
        %v956 = vunpack.c.l.b16 %v885
        %v957 = vunpack.c.h.b16 %v885
        %v958 = vunpack.c.l.b16 %v886
        %v959 = vunpack.c.h.b16 %v886
        %v960 = vunpack.c.l.b16 %v887
        %v961 = vunpack.c.h.b16 %v887
        %v962 = vunpack.c.l.b16 %v888
        %v963 = vunpack.c.h.b16 %v888
        %v964 = vunpack.c.l.b16 %v889
        %v965 = vunpack.c.h.b16 %v889
        %v966 = vunpack.c.l.b16 %v890
        %v967 = vunpack.c.h.b16 %v890
        %v968 = vunpack.c.l.b16 %v891
        %v969 = vunpack.c.h.b16 %v891
        %v970 = vunpack.c.l.b16 %v892
        %v971 = vunpack.c.h.b16 %v892
        %v972 = vunpack.c.l.b16 %v893
        %v973 = vunpack.c.h.b16 %v893
        %v974 = vunpack.c.l.b16 %v894
        %v975 = vunpack.c.h.b16 %v894
        %v976 = vunpack.c.l.b16 %v895
        %v977 = vunpack.c.h.b16 %v895
        %v978 = vunpack.c.l.b16 %v896
        %v979 = vunpack.c.h.b16 %v896
        %v980 = vunpack.c.l.b16 %v897
        %v981 = vunpack.c.h.b16 %v897
        %v982 = vunpack.c.l.b16 %v898
        %v983 = vunpack.c.h.b16 %v898
        %v984 = vunpack.c.l.b16 %v899
        %v985 = vunpack.c.h.b16 %v899
        %v986 = vunpack.c.l.b16 %v900
        %v987 = vunpack.c.h.b16 %v900
        %v988 = vunpack.c.l.b16 %v901
        %v989 = vunpack.c.h.b16 %v901
        %v990 = vunpack.c.l.b16 %v902
        %v991 = vunpack.c.h.b16 %v902
        %v992 = vunpack.c.l.b16 %v903
        %v993 = vunpack.c.h.b16 %v903
        %v994 = vunpack.c.l.b16 %v904
        %v995 = vunpack.c.h.b16 %v904
        %v996 = vunpack.c.l.b16 %v905
        %v997 = vunpack.c.h.b16 %v905
        %v998 = vunpack.c.l.b16 %v906
        %v999 = vunpack.c.h.b16 %v906
        %v1000 = vunpack.c.l.b16 %v907
        %v1001 = vunpack.c.h.b16 %v907
        %v1002 = vunpack.c.l.b16 %v908
        %v1003 = vunpack.c.h.b16 %v908
        %v1004 = vunpack.c.l.b16 %v909
        %v1005 = vunpack.c.h.b16 %v909
        %v1006 = vpack.c.b16 %v942, %v942
        %v1007 = vpack.c.b16 %v943, %v943
        %v1008 = vpack.c.b16 %v944, %v944
        %v1009 = vpack.c.b16 %v945, %v945
        %v1010 = vpack.c.b16 %v946, %v946
        %v1011 = vpack.c.b16 %v947, %v947
        %v1012 = vpack.c.b16 %v948, %v948
        %v1013 = vpack.c.b16 %v949, %v949
        %v1014 = vpack.c.b16 %v950, %v950
        %v1015 = vpack.c.b16 %v951, %v951
        %v1016 = vpack.c.b16 %v952, %v952
        %v1017 = vpack.c.b16 %v953, %v953
        %v1018 = vpack.c.b16 %v954, %v954
        %v1019 = vpack.c.b16 %v955, %v955
        %v1020 = vpack.c.b16 %v956, %v956
        %v1021 = vpack.c.b16 %v957, %v957
        %v1022 = vpack.c.b16 %v958, %v958
        %v1023 = vpack.c.b16 %v959, %v959
        %v1024 = vpack.c.b16 %v960, %v960
        %v1025 = vpack.c.b16 %v961, %v961
        %v1026 = vpack.c.b16 %v962, %v962
        %v1027 = vpack.c.b16 %v963, %v963
        %v1028 = vpack.c.b16 %v964, %v964
        %v1029 = vpack.c.b16 %v965, %v965
        %v1030 = vpack.c.b16 %v966, %v966
        %v1031 = vpack.c.b16 %v967, %v967
        %v1032 = vpack.c.b16 %v968, %v968
        %v1033 = vpack.c.b16 %v969, %v969
        %v1034 = vpack.c.b16 %v970, %v970
        %v1035 = vpack.c.b16 %v971, %v971
        %v1036 = vpack.c.b16 %v972, %v972
        %v1037 = vpack.c.b16 %v973, %v973
        %v1038 = vpack.c.b16 %v974, %v974
        %v1039 = vpack.c.b16 %v975, %v975
        %v1040 = vpack.c.b16 %v976, %v976
        %v1041 = vpack.c.b16 %v977, %v977
        %v1042 = vpack.c.b16 %v978, %v978
        %v1043 = vpack.c.b16 %v979, %v979
        %v1044 = vpack.c.b16 %v980, %v980
        %v1045 = vpack.c.b16 %v981, %v981
        %v1046 = vpack.c.b16 %v982, %v982
        %v1047 = vpack.c.b16 %v983, %v983
        %v1048 = vpack.c.b16 %v984, %v984
        %v1049 = vpack.c.b16 %v985, %v985
        %v1050 = vpack.c.b16 %v986, %v986
        %v1051 = vpack.c.b16 %v987, %v987
        %v1052 = vpack.c.b16 %v988, %v988
        %v1053 = vpack.c.b16 %v989, %v989
        %v1054 = vpack.c.b16 %v990, %v990
        %v1055 = vpack.c.b16 %v991, %v991
        %v1056 = vpack.c.b16 %v992, %v992
        %v1057 = vpack.c.b16 %v993, %v993
        %v1058 = vpack.c.b16 %v994, %v994
        %v1059 = vpack.c.b16 %v995, %v995
        %v1060 = vpack.c.b16 %v996, %v996
        %v1061 = vpack.c.b16 %v997, %v997
        %v1062 = vpack.c.b16 %v998, %v998
        %v1063 = vpack.c.b16 %v999, %v999
        %v1064 = vpack.c.b16 %v1000, %v1000
        %v1065 = vpack.c.b16 %v1001, %v1001
        %v1066 = vpack.c.b16 %v1002, %v1002
        %v1067 = vpack.c.b16 %v1003, %v1003
        %v1068 = vpack.c.b16 %v1004, %v1004
        %v1069 = vpack.c.b16 %v1005, %v1005
        %vm1134 = vcmask 519168
        %1135 = vst.msk [vmem:[%s243] sm:$0xf] %vm1134, %v1006
        %1136 = vst.msk [vmem:[%s243 + $0x4] sm:$0xf] %vm1134, %v1007
        %1137 = vst.msk [vmem:[%s243 + $0x8] sm:$0xf] %vm1134, %v1008
        %1138 = vst.msk [vmem:[%s243 + $0xc] sm:$0xf] %vm1134, %v1009
        %1139 = vst.msk [vmem:[%s243 + $0x10] sm:$0xf] %vm1134, %v1010
        %1140 = vst.msk [vmem:[%s243 + $0x14] sm:$0xf] %vm1134, %v1011
        %1141 = vst.msk [vmem:[%s243 + $0x18] sm:$0xf] %vm1134, %v1012
        %1142 = vst.msk [vmem:[%s243 + $0x1c] sm:$0xf] %vm1134, %v1013
        %1143 = vst.msk [vmem:[%s243 + $0x20] sm:$0xf] %vm1134, %v1014
        %1144 = vst.msk [vmem:[%s243 + $0x24] sm:$0xf] %vm1134, %v1015
        %1145 = vst.msk [vmem:[%s243 + $0x28] sm:$0xf] %vm1134, %v1016
        %1146 = vst.msk [vmem:[%s243 + $0x2c] sm:$0xf] %vm1134, %v1017
        %1147 = vst.msk [vmem:[%s243 + $0x30] sm:$0xf] %vm1134, %v1018
        %1148 = vst.msk [vmem:[%s243 + $0x34] sm:$0xf] %vm1134, %v1019
        %1149 = vst.msk [vmem:[%s243 + $0x38] sm:$0xf] %vm1134, %v1020
        %1150 = vst.msk [vmem:[%s243 + $0x3c] sm:$0xf] %vm1134, %v1021
        %1151 = vst.msk [vmem:[%s243 + $0x40] sm:$0xf] %vm1134, %v1022
        %1152 = vst.msk [vmem:[%s243 + $0x44] sm:$0xf] %vm1134, %v1023
        %1153 = vst.msk [vmem:[%s243 + $0x48] sm:$0xf] %vm1134, %v1024
        %1154 = vst.msk [vmem:[%s243 + $0x4c] sm:$0xf] %vm1134, %v1025
        %1155 = vst.msk [vmem:[%s243 + $0x50] sm:$0xf] %vm1134, %v1026
        %1156 = vst.msk [vmem:[%s243 + $0x54] sm:$0xf] %vm1134, %v1027
        %1157 = vst.msk [vmem:[%s243 + $0x58] sm:$0xf] %vm1134, %v1028
        %1158 = vst.msk [vmem:[%s243 + $0x5c] sm:$0xf] %vm1134, %v1029
        %1159 = vst.msk [vmem:[%s243 + $0x60] sm:$0xf] %vm1134, %v1030
        %1160 = vst.msk [vmem:[%s243 + $0x64] sm:$0xf] %vm1134, %v1031
        %1161 = vst.msk [vmem:[%s243 + $0x68] sm:$0xf] %vm1134, %v1032
        %1162 = vst.msk [vmem:[%s243 + $0x6c] sm:$0xf] %vm1134, %v1033
        %1163 = vst.msk [vmem:[%s243 + $0x70] sm:$0xf] %vm1134, %v1034
        %1164 = vst.msk [vmem:[%s243 + $0x74] sm:$0xf] %vm1134, %v1035
        %1165 = vst.msk [vmem:[%s243 + $0x78] sm:$0xf] %vm1134, %v1036
        %1166 = vst.msk [vmem:[%s243 + $0x7c] sm:$0xf] %vm1134, %v1037
        %1167 = vst.msk [vmem:[%s243 + $0x80] sm:$0xf] %vm1134, %v1038
        %1168 = vst.msk [vmem:[%s243 + $0x84] sm:$0xf] %vm1134, %v1039
        %1169 = vst.msk [vmem:[%s243 + $0x88] sm:$0xf] %vm1134, %v1040
        %1170 = vst.msk [vmem:[%s243 + $0x8c] sm:$0xf] %vm1134, %v1041
        %1171 = vst.msk [vmem:[%s243 + $0x90] sm:$0xf] %vm1134, %v1042
        %1172 = vst.msk [vmem:[%s243 + $0x94] sm:$0xf] %vm1134, %v1043
        %1173 = vst.msk [vmem:[%s243 + $0x98] sm:$0xf] %vm1134, %v1044
        %1174 = vst.msk [vmem:[%s243 + $0x9c] sm:$0xf] %vm1134, %v1045
        %1175 = vst.msk [vmem:[%s243 + $0xa0] sm:$0xf] %vm1134, %v1046
        %1176 = vst.msk [vmem:[%s243 + $0xa4] sm:$0xf] %vm1134, %v1047
        %1177 = vst.msk [vmem:[%s243 + $0xa8] sm:$0xf] %vm1134, %v1048
        %1178 = vst.msk [vmem:[%s243 + $0xac] sm:$0xf] %vm1134, %v1049
        %1179 = vst.msk [vmem:[%s243 + $0xb0] sm:$0xf] %vm1134, %v1050
        %1180 = vst.msk [vmem:[%s243 + $0xb4] sm:$0xf] %vm1134, %v1051
        %1181 = vst.msk [vmem:[%s243 + $0xb8] sm:$0xf] %vm1134, %v1052
        %1182 = vst.msk [vmem:[%s243 + $0xbc] sm:$0xf] %vm1134, %v1053
        %1183 = vst.msk [vmem:[%s243 + $0xc0] sm:$0xf] %vm1134, %v1054
        %1184 = vst.msk [vmem:[%s243 + $0xc4] sm:$0xf] %vm1134, %v1055
        %1185 = vst.msk [vmem:[%s243 + $0xc8] sm:$0xf] %vm1134, %v1056
        %1186 = vst.msk [vmem:[%s243 + $0xcc] sm:$0xf] %vm1134, %v1057
        %1187 = vst.msk [vmem:[%s243 + $0xd0] sm:$0xf] %vm1134, %v1058
        %1188 = vst.msk [vmem:[%s243 + $0xd4] sm:$0xf] %vm1134, %v1059
        %1189 = vst.msk [vmem:[%s243 + $0xd8] sm:$0xf] %vm1134, %v1060
        %1190 = vst.msk [vmem:[%s243 + $0xdc] sm:$0xf] %vm1134, %v1061
        %1191 = vst.msk [vmem:[%s243 + $0xe0] sm:$0xf] %vm1134, %v1062
        %1192 = vst.msk [vmem:[%s243 + $0xe4] sm:$0xf] %vm1134, %v1063
        %1193 = vst.msk [vmem:[%s243 + $0xe8] sm:$0xf] %vm1134, %v1064
        %1194 = vst.msk [vmem:[%s243 + $0xec] sm:$0xf] %vm1134, %v1065
        %1195 = vst.msk [vmem:[%s243 + $0xf0] sm:$0xf] %vm1134, %v1066
        %1196 = vst.msk [vmem:[%s243 + $0xf4] sm:$0xf] %vm1134, %v1067
        %1197 = vst.msk [vmem:[%s243 + $0xf8] sm:$0xf] %vm1134, %v1068
        %1198 = vst.msk [vmem:[%s243 + $0xfc] sm:$0xf] %vm1134, %v1069
        %p1199 = scmp.eq.s32.totalorder %s23, 0
        // Predicated region
        $region29: #{tpu_custom_call.1} parent=27 // pred_check
          %p1200 = pneg %p1199
        $region30: #{tpu_custom_call.1} parent=27 // pred_check_branch
          %1202 = sbr.rel (%p1200) target = $region32
        $region31: #{tpu_custom_call.1} parent=27 // pred_region
          %vm1203 = vcmask 523264
          %1204 = vst.msk [vmem:[#allocation2] sm:$0xff] %vm1203, 0.0
          %1205 = vst.msk [vmem:[#allocation3] sm:$0xff] %vm1203, 0.0
        $region32: #{tpu_custom_call.1} parent=27 // pred_fallthru
          _
        %v1206 = vld [vmem:[#allocation2] sm:$0xff]
        %vm1207 = vcmask 523264
        %v1208 = vsel %vm1207, %v624, 0.0
        %v1209 = vsel %vm1207, %v627, 0.0
        %v1210 = vadd.f32 %v1208, %v1209
        %v1211 = vsel %vm1207, %v632, 0.0
        %v1212 = vadd.f32 %v1210, %v1211
        %v1213 = vsel %vm1207, %v635, 0.0
        %v1214 = vadd.f32 %v1212, %v1213
        %v1215 = vsel %vm1207, %v640, 0.0
        %v1216 = vadd.f32 %v1214, %v1215
        %v1217 = vsel %vm1207, %v643, 0.0
        %v1218 = vadd.f32 %v1216, %v1217
        %v1219 = vsel %vm1207, %v648, 0.0
        %v1220 = vadd.f32 %v1218, %v1219
        %v1221 = vsel %vm1207, %v651, 0.0
        %v1222 = vadd.f32 %v1220, %v1221
        %v1223 = vsel %vm1207, %v656, 0.0
        %v1224 = vadd.f32 %v1222, %v1223
        %v1225 = vsel %vm1207, %v659, 0.0
        %v1226 = vadd.f32 %v1224, %v1225
        %v1227 = vsel %vm1207, %v664, 0.0
        %v1228 = vadd.f32 %v1226, %v1227
        %v1229 = vsel %vm1207, %v667, 0.0
        %v1230 = vadd.f32 %v1228, %v1229
        %v1231 = vsel %vm1207, %v672, 0.0
        %v1232 = vadd.f32 %v1230, %v1231
        %v1233 = vsel %vm1207, %v675, 0.0
        %v1234 = vadd.f32 %v1232, %v1233
        %v1235 = vsel %vm1207, %v680, 0.0
        %v1236 = vadd.f32 %v1234, %v1235
        %v1237 = vsel %vm1207, %v683, 0.0
        %v1238 = vadd.f32 %v1236, %v1237
        %v1239 = vsel %vm1207, %v688, 0.0
        %v1240 = vadd.f32 %v1238, %v1239
        %v1241 = vsel %vm1207, %v691, 0.0
        %v1242 = vadd.f32 %v1240, %v1241
        %v1243 = vsel %vm1207, %v696, 0.0
        %v1244 = vadd.f32 %v1242, %v1243
        %v1245 = vsel %vm1207, %v699, 0.0
        %v1246 = vadd.f32 %v1244, %v1245
        %v1247 = vsel %vm1207, %v704, 0.0
        %v1248 = vadd.f32 %v1246, %v1247
        %v1249 = vsel %vm1207, %v707, 0.0
        %v1250 = vadd.f32 %v1248, %v1249
        %v1251 = vsel %vm1207, %v712, 0.0
        %v1252 = vadd.f32 %v1250, %v1251
        %v1253 = vsel %vm1207, %v715, 0.0
        %v1254 = vadd.f32 %v1252, %v1253
        %v1255 = vsel %vm1207, %v720, 0.0
        %v1256 = vadd.f32 %v1254, %v1255
        %v1257 = vsel %vm1207, %v723, 0.0
        %v1258 = vadd.f32 %v1256, %v1257
        %v1259 = vsel %vm1207, %v728, 0.0
        %v1260 = vadd.f32 %v1258, %v1259
        %v1261 = vsel %vm1207, %v731, 0.0
        %v1262 = vadd.f32 %v1260, %v1261
        %v1263 = vsel %vm1207, %v736, 0.0
        %v1264 = vadd.f32 %v1262, %v1263
        %v1265 = vsel %vm1207, %v739, 0.0
        %v1266 = vadd.f32 %v1264, %v1265
        %v1267 = vsel %vm1207, %v744, 0.0
        %v1268 = vadd.f32 %v1266, %v1267
        %v1269 = vsel %vm1207, %v747, 0.0
        %v1270 = vadd.f32 %v1268, %v1269
        %v1271 = vsel %vm1207, %v752, 0.0
        %v1272 = vadd.f32 %v1270, %v1271
        %v1273 = vsel %vm1207, %v755, 0.0
        %v1274 = vadd.f32 %v1272, %v1273
        %v1275 = vsel %vm1207, %v760, 0.0
        %v1276 = vadd.f32 %v1274, %v1275
        %v1277 = vsel %vm1207, %v763, 0.0
        %v1278 = vadd.f32 %v1276, %v1277
        %v1279 = vsel %vm1207, %v768, 0.0
        %v1280 = vadd.f32 %v1278, %v1279
        %v1281 = vsel %vm1207, %v771, 0.0
        %v1282 = vadd.f32 %v1280, %v1281
        %v1283 = vsel %vm1207, %v776, 0.0
        %v1284 = vadd.f32 %v1282, %v1283
        %v1285 = vsel %vm1207, %v779, 0.0
        %v1286 = vadd.f32 %v1284, %v1285
        %v1287 = vsel %vm1207, %v784, 0.0
        %v1288 = vadd.f32 %v1286, %v1287
        %v1289 = vsel %vm1207, %v787, 0.0
        %v1290 = vadd.f32 %v1288, %v1289
        %v1291 = vsel %vm1207, %v792, 0.0
        %v1292 = vadd.f32 %v1290, %v1291
        %v1293 = vsel %vm1207, %v795, 0.0
        %v1294 = vadd.f32 %v1292, %v1293
        %v1295 = vsel %vm1207, %v800, 0.0
        %v1296 = vadd.f32 %v1294, %v1295
        %v1297 = vsel %vm1207, %v803, 0.0
        %v1298 = vadd.f32 %v1296, %v1297
        %v1299 = vsel %vm1207, %v808, 0.0
        %v1300 = vadd.f32 %v1298, %v1299
        %v1301 = vsel %vm1207, %v811, 0.0
        %v1302 = vadd.f32 %v1300, %v1301
        %v1303 = vsel %vm1207, %v816, 0.0
        %v1304 = vadd.f32 %v1302, %v1303
        %v1305 = vsel %vm1207, %v819, 0.0
        %v1306 = vadd.f32 %v1304, %v1305
        %v1307 = vsel %vm1207, %v824, 0.0
        %v1308 = vadd.f32 %v1306, %v1307
        %v1309 = vsel %vm1207, %v827, 0.0
        %v1310 = vadd.f32 %v1308, %v1309
        %v1311 = vsel %vm1207, %v832, 0.0
        %v1312 = vadd.f32 %v1310, %v1311
        %v1313 = vsel %vm1207, %v835, 0.0
        %v1314 = vadd.f32 %v1312, %v1313
        %v1315 = vsel %vm1207, %v840, 0.0
        %v1316 = vadd.f32 %v1314, %v1315
        %v1317 = vsel %vm1207, %v843, 0.0
        %v1318 = vadd.f32 %v1316, %v1317
        %v1319 = vsel %vm1207, %v848, 0.0
        %v1320 = vadd.f32 %v1318, %v1319
        %v1321 = vsel %vm1207, %v851, 0.0
        %v1322 = vadd.f32 %v1320, %v1321
        %v1323 = vsel %vm1207, %v856, 0.0
        %v1324 = vadd.f32 %v1322, %v1323
        %v1325 = vsel %vm1207, %v859, 0.0
        %v1326 = vadd.f32 %v1324, %v1325
        %v1327 = vsel %vm1207, %v864, 0.0
        %v1328 = vadd.f32 %v1326, %v1327
        %v1329 = vsel %vm1207, %v867, 0.0
        %v1330 = vadd.f32 %v1328, %v1329
        %v1331 = vsel %vm1207, %v872, 0.0
        %v1332 = vadd.f32 %v1330, %v1331
        %v1333 = vsel %vm1207, %v875, 0.0
        %v1334 = vadd.f32 %v1332, %v1333
        %v1335 = vadd.f32 %v1206, %v1334
        %1336 = vst.msk [vmem:[#allocation2] sm:$0xff] %vm1207, %v1335
        %v1337 = vld [vmem:[#allocation3] sm:$0xff]
        %v1338 = vmul.f32 %v624, %v624
        %v1339 = vmul.f32 %v627, %v627
        %v1340 = vmul.f32 %v632, %v632
        %v1341 = vmul.f32 %v635, %v635
        %v1342 = vmul.f32 %v640, %v640
        %v1343 = vmul.f32 %v643, %v643
        %v1344 = vmul.f32 %v648, %v648
        %v1345 = vmul.f32 %v651, %v651
        %v1346 = vmul.f32 %v656, %v656
        %v1347 = vmul.f32 %v659, %v659
        %v1348 = vmul.f32 %v664, %v664
        %v1349 = vmul.f32 %v667, %v667
        %v1350 = vmul.f32 %v672, %v672
        %v1351 = vmul.f32 %v675, %v675
        %v1352 = vmul.f32 %v680, %v680
        %v1353 = vmul.f32 %v683, %v683
        %v1354 = vmul.f32 %v688, %v688
        %v1355 = vmul.f32 %v691, %v691
        %v1356 = vmul.f32 %v696, %v696
        %v1357 = vmul.f32 %v699, %v699
        %v1358 = vmul.f32 %v704, %v704
        %v1359 = vmul.f32 %v707, %v707
        %v1360 = vmul.f32 %v712, %v712
        %v1361 = vmul.f32 %v715, %v715
        %v1362 = vmul.f32 %v720, %v720
        %v1363 = vmul.f32 %v723, %v723
        %v1364 = vmul.f32 %v728, %v728
        %v1365 = vmul.f32 %v731, %v731
        %v1366 = vmul.f32 %v736, %v736
        %v1367 = vmul.f32 %v739, %v739
        %v1368 = vmul.f32 %v744, %v744
        %v1369 = vmul.f32 %v747, %v747
        %v1370 = vmul.f32 %v752, %v752
        %v1371 = vmul.f32 %v755, %v755
        %v1372 = vmul.f32 %v760, %v760
        %v1373 = vmul.f32 %v763, %v763
        %v1374 = vmul.f32 %v768, %v768
        %v1375 = vmul.f32 %v771, %v771
        %v1376 = vmul.f32 %v776, %v776
        %v1377 = vmul.f32 %v779, %v779
        %v1378 = vmul.f32 %v784, %v784
        %v1379 = vmul.f32 %v787, %v787
        %v1380 = vmul.f32 %v792, %v792
        %v1381 = vmul.f32 %v795, %v795
        %v1382 = vmul.f32 %v800, %v800
        %v1383 = vmul.f32 %v803, %v803
        %v1384 = vmul.f32 %v808, %v808
        %v1385 = vmul.f32 %v811, %v811
        %v1386 = vmul.f32 %v816, %v816
        %v1387 = vmul.f32 %v819, %v819
        %v1388 = vmul.f32 %v824, %v824
        %v1389 = vmul.f32 %v827, %v827
        %v1390 = vmul.f32 %v832, %v832
        %v1391 = vmul.f32 %v835, %v835
        %v1392 = vmul.f32 %v840, %v840
        %v1393 = vmul.f32 %v843, %v843
        %v1394 = vmul.f32 %v848, %v848
        %v1395 = vmul.f32 %v851, %v851
        %v1396 = vmul.f32 %v856, %v856
        %v1397 = vmul.f32 %v859, %v859
        %v1398 = vmul.f32 %v864, %v864
        %v1399 = vmul.f32 %v867, %v867
        %v1400 = vmul.f32 %v872, %v872
        %v1401 = vmul.f32 %v875, %v875
        %v1402 = vsel %vm1207, %v1338, 0.0
        %v1403 = vsel %vm1207, %v1339, 0.0
        %v1404 = vadd.f32 %v1402, %v1403
        %v1405 = vsel %vm1207, %v1340, 0.0
        %v1406 = vadd.f32 %v1404, %v1405
        %v1407 = vsel %vm1207, %v1341, 0.0
        %v1408 = vadd.f32 %v1406, %v1407
        %v1409 = vsel %vm1207, %v1342, 0.0
        %v1410 = vadd.f32 %v1408, %v1409
        %v1411 = vsel %vm1207, %v1343, 0.0
        %v1412 = vadd.f32 %v1410, %v1411
        %v1413 = vsel %vm1207, %v1344, 0.0
        %v1414 = vadd.f32 %v1412, %v1413
        %v1415 = vsel %vm1207, %v1345, 0.0
        %v1416 = vadd.f32 %v1414, %v1415
        %v1417 = vsel %vm1207, %v1346, 0.0
        %v1418 = vadd.f32 %v1416, %v1417
        %v1419 = vsel %vm1207, %v1347, 0.0
        %v1420 = vadd.f32 %v1418, %v1419
        %v1421 = vsel %vm1207, %v1348, 0.0
        %v1422 = vadd.f32 %v1420, %v1421
        %v1423 = vsel %vm1207, %v1349, 0.0
        %v1424 = vadd.f32 %v1422, %v1423
        %v1425 = vsel %vm1207, %v1350, 0.0
        %v1426 = vadd.f32 %v1424, %v1425
        %v1427 = vsel %vm1207, %v1351, 0.0
        %v1428 = vadd.f32 %v1426, %v1427
        %v1429 = vsel %vm1207, %v1352, 0.0
        %v1430 = vadd.f32 %v1428, %v1429
        %v1431 = vsel %vm1207, %v1353, 0.0
        %v1432 = vadd.f32 %v1430, %v1431
        %v1433 = vsel %vm1207, %v1354, 0.0
        %v1434 = vadd.f32 %v1432, %v1433
        %v1435 = vsel %vm1207, %v1355, 0.0
        %v1436 = vadd.f32 %v1434, %v1435
        %v1437 = vsel %vm1207, %v1356, 0.0
        %v1438 = vadd.f32 %v1436, %v1437
        %v1439 = vsel %vm1207, %v1357, 0.0
        %v1440 = vadd.f32 %v1438, %v1439
        %v1441 = vsel %vm1207, %v1358, 0.0
        %v1442 = vadd.f32 %v1440, %v1441
        %v1443 = vsel %vm1207, %v1359, 0.0
        %v1444 = vadd.f32 %v1442, %v1443
        %v1445 = vsel %vm1207, %v1360, 0.0
        %v1446 = vadd.f32 %v1444, %v1445
        %v1447 = vsel %vm1207, %v1361, 0.0
        %v1448 = vadd.f32 %v1446, %v1447
        %v1449 = vsel %vm1207, %v1362, 0.0
        %v1450 = vadd.f32 %v1448, %v1449
        %v1451 = vsel %vm1207, %v1363, 0.0
        %v1452 = vadd.f32 %v1450, %v1451
        %v1453 = vsel %vm1207, %v1364, 0.0
        %v1454 = vadd.f32 %v1452, %v1453
        %v1455 = vsel %vm1207, %v1365, 0.0
        %v1456 = vadd.f32 %v1454, %v1455
        %v1457 = vsel %vm1207, %v1366, 0.0
        %v1458 = vadd.f32 %v1456, %v1457
        %v1459 = vsel %vm1207, %v1367, 0.0
        %v1460 = vadd.f32 %v1458, %v1459
        %v1461 = vsel %vm1207, %v1368, 0.0
        %v1462 = vadd.f32 %v1460, %v1461
        %v1463 = vsel %vm1207, %v1369, 0.0
        %v1464 = vadd.f32 %v1462, %v1463
        %v1465 = vsel %vm1207, %v1370, 0.0
        %v1466 = vadd.f32 %v1464, %v1465
        %v1467 = vsel %vm1207, %v1371, 0.0
        %v1468 = vadd.f32 %v1466, %v1467
        %v1469 = vsel %vm1207, %v1372, 0.0
        %v1470 = vadd.f32 %v1468, %v1469
        %v1471 = vsel %vm1207, %v1373, 0.0
        %v1472 = vadd.f32 %v1470, %v1471
        %v1473 = vsel %vm1207, %v1374, 0.0
        %v1474 = vadd.f32 %v1472, %v1473
        %v1475 = vsel %vm1207, %v1375, 0.0
        %v1476 = vadd.f32 %v1474, %v1475
        %v1477 = vsel %vm1207, %v1376, 0.0
        %v1478 = vadd.f32 %v1476, %v1477
        %v1479 = vsel %vm1207, %v1377, 0.0
        %v1480 = vadd.f32 %v1478, %v1479
        %v1481 = vsel %vm1207, %v1378, 0.0
        %v1482 = vadd.f32 %v1480, %v1481
        %v1483 = vsel %vm1207, %v1379, 0.0
        %v1484 = vadd.f32 %v1482, %v1483
        %v1485 = vsel %vm1207, %v1380, 0.0
        %v1486 = vadd.f32 %v1484, %v1485
        %v1487 = vsel %vm1207, %v1381, 0.0
        %v1488 = vadd.f32 %v1486, %v1487
        %v1489 = vsel %vm1207, %v1382, 0.0
        %v1490 = vadd.f32 %v1488, %v1489
        %v1491 = vsel %vm1207, %v1383, 0.0
        %v1492 = vadd.f32 %v1490, %v1491
        %v1493 = vsel %vm1207, %v1384, 0.0
        %v1494 = vadd.f32 %v1492, %v1493
        %v1495 = vsel %vm1207, %v1385, 0.0
        %v1496 = vadd.f32 %v1494, %v1495
        %v1497 = vsel %vm1207, %v1386, 0.0
        %v1498 = vadd.f32 %v1496, %v1497
        %v1499 = vsel %vm1207, %v1387, 0.0
        %v1500 = vadd.f32 %v1498, %v1499
        %v1501 = vsel %vm1207, %v1388, 0.0
        %v1502 = vadd.f32 %v1500, %v1501
        %v1503 = vsel %vm1207, %v1389, 0.0
        %v1504 = vadd.f32 %v1502, %v1503
        %v1505 = vsel %vm1207, %v1390, 0.0
        %v1506 = vadd.f32 %v1504, %v1505
        %v1507 = vsel %vm1207, %v1391, 0.0
        %v1508 = vadd.f32 %v1506, %v1507
        %v1509 = vsel %vm1207, %v1392, 0.0
        %v1510 = vadd.f32 %v1508, %v1509
        %v1511 = vsel %vm1207, %v1393, 0.0
        %v1512 = vadd.f32 %v1510, %v1511
        %v1513 = vsel %vm1207, %v1394, 0.0
        %v1514 = vadd.f32 %v1512, %v1513
        %v1515 = vsel %vm1207, %v1395, 0.0
        %v1516 = vadd.f32 %v1514, %v1515
        %v1517 = vsel %vm1207, %v1396, 0.0
        %v1518 = vadd.f32 %v1516, %v1517
        %v1519 = vsel %vm1207, %v1397, 0.0
        %v1520 = vadd.f32 %v1518, %v1519
        %v1521 = vsel %vm1207, %v1398, 0.0
        %v1522 = vadd.f32 %v1520, %v1521
        %v1523 = vsel %vm1207, %v1399, 0.0
        %v1524 = vadd.f32 %v1522, %v1523
        %v1525 = vsel %vm1207, %v1400, 0.0
        %v1526 = vadd.f32 %v1524, %v1525
        %v1527 = vsel %vm1207, %v1401, 0.0
        %v1528 = vadd.f32 %v1526, %v1527
        %v1529 = vadd.f32 %v1337, %v1528
        %1530 = vst.msk [vmem:[#allocation3] sm:$0xff] %vm1207, %v1529
        %p1531 = scmp.eq.s32.totalorder %s23, 3
        // Predicated region
        $region33: #{tpu_custom_call.1} parent=27 // pred_check
          %p1532 = pneg %p1531
        $region34: #{tpu_custom_call.1} parent=27 // pred_check_branch
          %1534 = sbr.rel (%p1532) target = $region36
        $region35: #{tpu_custom_call.1} parent=27 // pred_region
          %v1535 = vld [vmem:[#allocation2] sm:$0xff]
          %v1536 = vsel %vm1207, %v1535, 0.0
          %v1537 = vrot.slane %v1536, 4
          %v1538 = vadd.f32 %v1536, %v1537
          %v1539 = vrot.slane %v1538, 2
          %v1540 = vadd.f32 %v1538, %v1539
          %v1541 = vrot.slane %v1540, 1
          %v1542 = vadd.f32 %v1540, %v1541
          %vm1543 = vcmask 516096
          %1544 = vst.msk [vmem:[#allocation4] sm:$0x1] %vm1543, %v1542
          %v1545 = vld [vmem:[#allocation3] sm:$0xff]
          %v1546 = vsel %vm1207, %v1545, 0.0
          %v1547 = vrot.slane %v1546, 4
          %v1548 = vadd.f32 %v1546, %v1547
          %v1549 = vrot.slane %v1548, 2
          %v1550 = vadd.f32 %v1548, %v1549
          %v1551 = vrot.slane %v1550, 1
          %v1552 = vadd.f32 %v1550, %v1551
          %1553 = vst.msk [vmem:[#allocation6] sm:$0x1] %vm1543, %v1552
        $region36: #{tpu_custom_call.1} parent=27 // pred_fallthru
          _
        %s1554 = smul.u32 64, %s23
        %p1555 = scmp.lt.s32.totalorder %s1554, 255
        %s1556 = scalar_select %p1555, %s1554, 255
        %p1557 = scmp.lt.s32.totalorder %s22, 0
        %s1558 = scalar_select %p1557, %s22, 0
        %s1559 = sadd.s32 %s1558, %s1556
        %s1560 = smul.addr %s1559, 4
        %s1561 = scalar_lea.vmem %s2, %s1560
        // Predicated region
        $region37: #{tpu_custom_call.1} parent=27 // pred_check
          %p1562 = pneg %p102
        $region38: #{tpu_custom_call.1} parent=27 // pred_check_branch
          %1564 = sbr.rel (%p1562) target = $region40
        $region39: #{tpu_custom_call.1} parent=27 // pred_region
          %s1565 = smul.u32 64, %s23
        $region40: #{tpu_custom_call.1} parent=27 // pred_fallthru
          _
        // Predicated region
        $region41: #{tpu_custom_call.1} parent=27 // pred_check
          %p1566 = pneg %p128
        $region42: #{tpu_custom_call.1} parent=27 // pred_check_branch
          %1568 = sbr.rel (%p1566) target = $region44
        $region43: #{tpu_custom_call.1} parent=27 // pred_region
          %s1570 = ssub.s32 16, 16
          %1571 = vsyncadd [#allocation5], %s1570
          %s1572 = smul.addr %s22, 16
          %s1573 = scalar_lea.hbm %s3, %s1572
          %s1575 = sshll.u32 [#allocation4], 4
          %s1576 = int_to_ptr.vmem [resolvable:$true] %s1575
          %1578 = dma.vmem_to_hbm [thread:$0]  %s1576, 16, %s1573, [#allocation5]
        $region44: #{tpu_custom_call.1} parent=27 // pred_fallthru
          _
        // Predicated region
        $region45: #{tpu_custom_call.1} parent=27 // pred_check
          %p1579 = pneg %p154
        $region46: #{tpu_custom_call.1} parent=27 // pred_check_branch
          %1581 = sbr.rel (%p1579) target = $region48
        $region47: #{tpu_custom_call.1} parent=27 // pred_region
          %s1583 = ssub.s32 16, 16
          %1584 = vsyncadd [#allocation7], %s1583
          %s1585 = smul.addr %s22, 16
          %s1586 = scalar_lea.hbm %s4, %s1585
          %s1588 = sshll.u32 [#allocation6], 4
          %s1589 = int_to_ptr.vmem [resolvable:$true] %s1588
          %1591 = dma.vmem_to_hbm [thread:$0]  %s1589, 16, %s1586, [#allocation7]
        $region48: #{tpu_custom_call.1} parent=27 // pred_fallthru
          _
        // Predicated region
        $region49: #{tpu_custom_call.1} parent=27 // pred_check
          %p1592 = pneg %p128
        $region50: #{tpu_custom_call.1} parent=27 // pred_check_branch
          %1594 = sbr.rel (%p1592) target = $region52
        $region51: #{tpu_custom_call.1} parent=27 // pred_region
          %1595 = dma.done [#allocation5], 16
        $region52: #{tpu_custom_call.1} parent=27 // pred_fallthru
          _
        // Predicated region
        $region53: #{tpu_custom_call.1} parent=27 // pred_check
          %p1596 = pneg %p154
        $region54: #{tpu_custom_call.1} parent=27 // pred_check_branch
          %1598 = sbr.rel (%p1596) target = $region56
        $region55: #{tpu_custom_call.1} parent=27 // pred_region
          %1599 = dma.done [#allocation7], 16
        $region56: #{tpu_custom_call.1} parent=27 // pred_fallthru
          _
      $region28: #{tpu_custom_call.1} parent=5 // pred_fallthru
        _
      %p1600 = scmp.le.s32.totalorder 2, %s13
      // Predicated region
      $region57: #{tpu_custom_call.1} parent=5 // pred_check
        %p1601 = pneg %p1600
      $region58: #{tpu_custom_call.1} parent=5 // pred_check_branch
        %1603 = sbr.rel (%p1601) target = $region60
      $region59: #{tpu_custom_call.1} parent=5 // pred_region
        %s1604 = ssub.s32 %s13, 2
        // Predicated region
        $region61: #{tpu_custom_call.1} parent=59 // pred_check
          %p1605 = pneg %p108
        $region62: #{tpu_custom_call.1} parent=59 // pred_check_branch
          %1607 = sbr.rel (%p1605) target = $region64
        $region63: #{tpu_custom_call.1} parent=59 // pred_region
          %s1608 = smul.u32 64, %s25
          %p1609 = scmp.lt.s32.totalorder %s1608, 255
          %s1610 = scalar_select %p1609, %s1608, 255
          %p1611 = scmp.lt.s32.totalorder %s24, 0
          %s1612 = scalar_select %p1611, %s24, 0
          %s1613 = sadd.s32 %s1612, %s1610
          %s1614 = smul.addr %s1613, 4
          %s1615 = scalar_lea.vmem %s2, %s1614
        $region64: #{tpu_custom_call.1} parent=59 // pred_fallthru
          _
      $region60: #{tpu_custom_call.1} parent=5 // pred_fallthru
        _
    $region6: #{tpu_custom_call.1} parent=1 // loop_footer
      %s17 = sadd.s32 1, %s13
    $region7: #{tpu_custom_call.1} parent=1 // loop_footer_branch
      %12 = sbr.rel target = $region3
    $region8: #{tpu_custom_call.1} parent=1 // loop_exit
      _
    %1616 = vsyncpa [#allocation5], 1
    %s1617 = scalar_lea.sflag [#allocation5], 1
    %1618 = vsyncpa %s1617, 1
    %1619 = vsyncpa [#allocation7], 1

</llo_original>
